<compile_context>
chip_gen: v7x
topology: tpu7x:2x2x1
jax: 0.10.0
libtpu: 0.0.40
codegen_flags: <defaults>
</compile_context>

<pallas_src>
import functools

import jax
import jax.numpy as jnp
import numpy as np
from jax.experimental import pallas as pl
from jax.experimental.pallas import tpu as pltpu


def _round_up(x, m):
    return ((x + m - 1) // m) * m


def _elementwise_bf16_ok():
    # v6e / v7x have bf16 VPU + EUP; v5e and older do not -> keep f32 there.
    try:
        kind = jax.devices()[0].device_kind.lower()
    except Exception:
        return False
    return not any(v in kind for v in ("v2", "v3", "v4", "v5"))


# ----------------------------------------------------------------------------
# Pallas kernels
# ----------------------------------------------------------------------------

def _kcnn_kernel(word_ref, ent_ref, tw_ref, tb_ref, *rest,
                 seq_len, filter_sizes, n_filters, d_pad, ew_bf16):
    # word_ref : (tile_n*L, Dw) bf16   word embeddings (title-major rows)
    # ent_ref  : (tile_n*L, De) bf16   entity embeddings
    # tw_ref   : (De, Dw)       bf16   entity->word transform weight
    # tb_ref   : (1, Dw)        f32    transform bias
    # rest     : per filter size fs: w_ref (2*Dw, fs*F) bf16, b_ref (1, F) f32
    #            followed by out_ref (tile_n, d_pad) bf16
    conv_refs = rest[:-1]
    out_ref = rest[-1]

    L = seq_len
    ML, Dw = word_ref.shape
    TN = ML // L
    F = n_filters
    ew_dtype = jnp.bfloat16 if ew_bf16 else jnp.float32

    # --- entity transform: one MXU matmul over the whole (tile_n*L) slab ------
    tr = jnp.dot(ent_ref[...], tw_ref[...],
                 preferred_element_type=jnp.float32)              # (ML, Dw) f32
    tr = jnp.tanh(tr.astype(ew_dtype) + tb_ref[...].astype(ew_dtype))

    # --- channel slab (ML, 2*Dw): conv contraction runs jointly over (c, d) ---
    # so every filter size needs exactly ONE wide MXU matmul (N = fs*F).
    x2 = jnp.concatenate([word_ref[...], tr.astype(jnp.bfloat16)], axis=-1)

    feats = []
    for idx, fs in enumerate(filter_sizes):
        w_ref = conv_refs[2 * idx]        # (2*Dw, fs*F) bf16, pre-fused
        b_ref = conv_refs[2 * idx + 1]    # (1, F)       f32
        P = L - fs + 1
        z = jnp.dot(x2, w_ref[...], preferred_element_type=jnp.float32)  # (ML, fs*F)
        z4 = z.reshape(TN, L, fs, F)       # ONE reshape per filter size
        acc = z4[:, 0:P, 0, :]
        for t in range(1, fs):             # t-shift accumulation: cheap VPU adds
            acc = acc + z4[:, t:t + P, t, :]
        y = jnp.maximum(acc.astype(ew_dtype) + b_ref[...].astype(ew_dtype)[None],
                        0.0)                                      # bias + ReLU
        feats.append(jnp.max(y, axis=1).astype(out_ref.dtype))    # (TN, F)

    total = F * len(filter_sizes)
    if d_pad > total:
        feats.append(jnp.zeros((TN, d_pad - total), out_ref.dtype))
    # Single lane-dense (multiple-of-128) store of the concatenated features.
    out_ref[...] = jnp.concatenate(feats, axis=-1)


def _attention_kernel(clicked_ref, news_ref, user_ref):
    # clicked_ref: (tile_b, H, Dp) bf16, news_ref: (tile_b, Dp) bf16
    # user_ref   : (tile_b, Dp) f32.  Dp multiple of 128 -> lane-dense.
    clicked = clicked_ref[...].astype(jnp.float32)
    news = news_ref[...].astype(jnp.float32)
    logits = jnp.sum(clicked * news[:, None, :], axis=-1)         # (tb, H)
    m = jnp.max(logits, axis=-1, keepdims=True)
    e = jnp.exp(logits - m)                                       # unnormalized
    acc = jnp.sum(clicked * e[:, :, None], axis=1)                # (tb, Dp)
    # Fold softmax normalization into the weighted sum: divide -> EUP reciprocal.
    inv = pl.reciprocal(jnp.sum(e, axis=-1, keepdims=True), approx=True)
    user_ref[...] = acc * inv


# ----------------------------------------------------------------------------
# Pallas wrappers
# ----------------------------------------------------------------------------

def kcnn(params, words, entities, cfg, tile_n):
    """words/entities: (N, L) int32 -> (N, D_pad) bf16 features (padded lanes 0)."""
    N, L = words.shape
    Dw = cfg["word_dim"]
    De = cfg["entity_dim"]
    F = cfg["n_filters"]
    fsizes = tuple(cfg["filter_sizes"])
    D_pad = _round_up(F * len(fsizes), 128)

    # TODO(synk): embedding gathers stay in XLA; an in-kernel gather would need a
    # PrefetchScalarGridSpec row-gather / manual DMA from HBM vocab tables.
    word2d = jnp.take(params["word_emb"], words, axis=0
                      ).astype(jnp.bfloat16).reshape(N * L, Dw)
    ent2d = jnp.take(params["entity_emb"], entities, axis=0
                     ).astype(jnp.bfloat16).reshape(N * L, De)

    # Tile over the title axis; keep tile_n a multiple of 8.
    tile_n = max(8, _round_up(min(tile_n, _round_up(N, 8)), 8))
    N_pad = _round_up(N, tile_n)
    if N_pad != N:
        pad_rows = (N_pad - N) * L
        word2d = jnp.pad(word2d, ((0, pad_rows), (0, 0)))
        ent2d = jnp.pad(ent2d, ((0, pad_rows), (0, 0)))

    in_arrays = [word2d, ent2d,
                 params["transform_w"].astype(jnp.bfloat16),
                 params["transform_b"].reshape(1, Dw)]
    in_specs = [
        pl.BlockSpec((tile_n * L, Dw), lambda i: (i, 0)),
        pl.BlockSpec((tile_n * L, De), lambda i: (i, 0)),
        pl.BlockSpec((De, Dw), lambda i: (0, 0)),        # VMEM-resident weights
        pl.BlockSpec((1, Dw), lambda i: (0, 0)),
    ]
    for fs in fsizes:
        # PyTorch Conv2d weight (F, 2, fs, Dw) -> fused (2*Dw, fs*F):
        # row = c*Dw + d, col = t*F + f  (matches the (word|entity) channel slab).
        w_fused = jnp.transpose(params["conv"][fs]["w"], (1, 3, 2, 0)
                                ).reshape(2 * Dw, fs * F).astype(jnp.bfloat16)
        in_arrays += [w_fused, params["conv"][fs]["b"].reshape(1, F)]
        in_specs += [pl.BlockSpec((2 * Dw, fs * F), lambda i: (0, 0)),
                     pl.BlockSpec((1, F), lambda i: (0, 0))]

    # Explicit VMEM budget: double-buffered input/output tiles + resident weights
    # + in-kernel intermediates, clamped below v7x's 64 MiB physical VMEM.
    conv_cols = sum(fs * F for fs in fsizes)
    in_bytes = tile_n * L * (Dw + De) * 2                    # bf16, one slot
    out_bytes = tile_n * D_pad * 2
    w_bytes = sum(int(np.prod(a.shape)) * a.dtype.itemsize for a in in_arrays[2:])
    scratch = tile_n * L * (Dw * 4 + 2 * Dw * 2 + conv_cols * 4)
    vmem_limit = int(2 * (in_bytes + out_bytes) + w_bytes + 2 * scratch + (4 << 20))
    vmem_limit = min(max(vmem_limit, 32 << 20), 56 << 20)

    kernel = functools.partial(_kcnn_kernel, seq_len=L, filter_sizes=fsizes,
                               n_filters=F, d_pad=D_pad,
                               ew_bf16=_elementwise_bf16_ok())
    out = pl.pallas_call(
        kernel,
        grid=(pl.cdiv(N_pad, tile_n),),
        in_specs=in_specs,
        out_specs=pl.BlockSpec((tile_n, D_pad), lambda i: (i, 0)),
        out_shape=jax.ShapeDtypeStruct((N_pad, D_pad), jnp.bfloat16),
        compiler_params=pltpu.CompilerParams(
            dimension_semantics=("parallel",),
            vmem_limit_bytes=vmem_limit),
    )(*in_arrays)
    return out[:N]


def attention(clicked_emb, news_emb, tile_b=256):
    """clicked_emb: (B, H, Dp) bf16, news_emb: (B, Dp) bf16 -> (B, Dp) f32."""
    B, H, Dp = clicked_emb.shape
    if tile_b >= B:
        tile_b = B                               # single block == full array dims
    else:
        tile_b = max(8, _round_up(tile_b, 8))
    B_pad = _round_up(B, tile_b)
    if B_pad != B:
        clicked_emb = jnp.pad(clicked_emb, ((0, B_pad - B), (0, 0), (0, 0)))
        news_emb = jnp.pad(news_emb, ((0, B_pad - B), (0, 0)))
    out = pl.pallas_call(
        _attention_kernel,
        grid=(B_pad // tile_b,),
        in_specs=[pl.BlockSpec((tile_b, H, Dp), lambda i: (i, 0, 0)),
                  pl.BlockSpec((tile_b, Dp), lambda i: (i, 0))],
        out_specs=pl.BlockSpec((tile_b, Dp), lambda i: (i, 0)),
        out_shape=jax.ShapeDtypeStruct((B_pad, Dp), jnp.float32),
        compiler_params=pltpu.CompilerParams(
            dimension_semantics=("parallel",)),
    )(clicked_emb, news_emb)
    return out[:B]


# ----------------------------------------------------------------------------
# Model glue (parameters, forward)
# ----------------------------------------------------------------------------

def init_params(key, cfg):
    keys = jax.random.split(key, 3 + len(cfg["filter_sizes"]))
    p = {}
    p["word_emb"] = 0.1 * jax.random.normal(
        keys[0], (cfg["word_vocab"], cfg["word_dim"]), jnp.float32)
    p["entity_emb"] = 0.1 * jax.random.normal(
        keys[1], (cfg["entity_vocab"], cfg["entity_dim"]), jnp.float32)
    p["transform_w"] = 0.1 * jax.random.normal(
        keys[2], (cfg["entity_dim"], cfg["word_dim"]), jnp.float32)
    p["transform_b"] = jnp.zeros((cfg["word_dim"],), jnp.float32)
    p["conv"] = {}
    for idx, fs in enumerate(cfg["filter_sizes"]):
        kw, kb = jax.random.split(keys[3 + idx])
        p["conv"][fs] = {
            # Native PyTorch Conv2d layout (F, C=2, fs, word_dim)
            "w": 0.1 * jax.random.normal(
                kw, (cfg["n_filters"], 2, fs, cfg["word_dim"]), jnp.float32),
            "b": 0.01 * jax.random.normal(kb, (cfg["n_filters"],), jnp.float32),
        }
    return p


def attention_model_forward(params, clicked_words, clicked_entities,
                            news_words, news_entities, cfg,
                            tile_n=512, tile_b=256):
    B, H, L = clicked_words.shape
    D = cfg["n_filters"] * len(cfg["filter_sizes"])
    # Run the fused KCNN once over clicked + candidate titles (1 pallas_call).
    words_all = jnp.concatenate(
        [clicked_words.reshape(-1, L), news_words], axis=0)
    ents_all = jnp.concatenate(
        [clicked_entities.reshape(-1, L), news_entities], axis=0)
    emb_all = kcnn(params, words_all, ents_all, cfg, tile_n)      # (B*H+B, D_pad) bf16
    clicked_emb = emb_all[:B * H].reshape(B, H, -1)
    news_emb_pad = emb_all[B * H:]
    user_emb_pad = attention(clicked_emb, news_emb_pad, tile_b)   # (B, D_pad) f32
    # Padded lanes are exactly zero, so slicing recovers the exact result.
    return user_emb_pad[:, :D], news_emb_pad[:, :D].astype(jnp.float32)


# ----------------------------------------------------------------------------
# Pure-JAX f32 reference (for correctness check only)
# ----------------------------------------------------------------------------

def reference_forward(params, clicked_words, clicked_entities,
                      news_words, news_entities, cfg):
    L = cfg["max_title_length"]

    def kcnn_ref(words, ents):
        w = params["word_emb"][words]                                   # (N, L, Dw)
        e = params["entity_emb"][ents]                                  # (N, L, De)
        tr = jnp.tanh(jnp.einsum("nld,dk->nlk", e, params["transform_w"],
                                 precision="highest") + params["transform_b"])
        x = jnp.stack([w, tr], axis=1)                                  # (N, 2, L, Dw)
        outs = []
        for fs in cfg["filter_sizes"]:
            wc = params["conv"][fs]["w"]                                # (F, 2, fs, Dw)
            b = params["conv"][fs]["b"]
            zs = []
            for pos in range(L - fs + 1):
                patch = x[:, :, pos:pos + fs, :]
                zs.append(jnp.einsum("nctd,fctd->nf", patch, wc,
                                     precision="highest"))
            z = jnp.stack(zs, axis=1) + b                               # (N, P, F)
            outs.append(jnp.max(jax.nn.relu(z), axis=1))
        return jnp.concatenate(outs, axis=-1)

    B, H, _ = clicked_words.shape
    clicked = kcnn_ref(clicked_words.reshape(-1, L),
                       clicked_entities.reshape(-1, L)).reshape(B, H, -1)
    news = kcnn_ref(news_words, news_entities)
    attn = jax.nn.softmax(jnp.sum(clicked * news[:, None, :], axis=-1), axis=-1)
    user = jnp.sum(clicked * attn[:, :, None], axis=1)
    return user, news


# ----------------------------------------------------------------------------
# Demo
# ----------------------------------------------------------------------------

if __name__ == "__main__":
    cfg = dict(
        max_click_history=4,
        max_title_length=8,
        word_dim=16,
        entity_dim=16,
        n_filters=8,
        filter_sizes=(1, 2),
        word_vocab=50,
        entity_vocab=30,
    )
    batch = 2

    key = jax.random.PRNGKey(0)
    k_param, k1, k2, k3, k4 = jax.random.split(key, 5)
    params = init_params(k_param, cfg)

    clicked_words = jax.random.randint(
        k1, (batch, cfg["max_click_history"], cfg["max_title_length"]),
        0, cfg["word_vocab"], jnp.int32)
    clicked_entities = jax.random.randint(
        k2, (batch, cfg["max_click_history"], cfg["max_title_length"]),
        0, cfg["entity_vocab"], jnp.int32)
    news_words = jax.random.randint(
        k3, (batch, cfg["max_title_length"]), 0, cfg["word_vocab"], jnp.int32)
    news_entities = jax.random.randint(
        k4, (batch, cfg["max_title_length"]), 0, cfg["entity_vocab"], jnp.int32)

    # tile_n=8 exercises a multi-step "parallel" grid at these tiny shapes; use
    # tile_n=512-2048 and tile_b=128-512 at production sizes (VMEM budget is set
    # explicitly and capped below v7x's 64 MiB physical VMEM).
    fwd = jax.jit(functools.partial(attention_model_forward, cfg=cfg,
                                    tile_n=8, tile_b=256))
    user_emb, news_emb = fwd(params, clicked_words, clicked_entities,
                             news_words, news_entities)
    jax.block_until_ready((user_emb, news_emb))

    D = cfg["n_filters"] * len(cfg["filter_sizes"])
    assert user_emb.shape == (batch, D) and news_emb.shape == (batch, D)
    assert bool(jnp.all(jnp.isfinite(user_emb)))
    assert bool(jnp.all(jnp.isfinite(news_emb)))

    # Loose tolerance: feature slab / matmuls run in bf16 with f32 accumulation.
    user_ref, news_ref = reference_forward(params, clicked_words, clicked_entities,
                                           news_words, news_entities, cfg)
    assert np.allclose(np.asarray(news_emb), np.asarray(news_ref),
                       atol=3e-2, rtol=3e-2)
    assert np.allclose(np.asarray(user_emb), np.asarray(user_ref),
                       atol=3e-2, rtol=3e-2)
    print("KERNEL_OK")
</pallas_src>

<mosaic_0001>
module attributes {stable_mosaic.version = 11 : i64} {
  func.func @_attention_kernel(%arg0: i32, %arg1: memref<2x4x128xbf16, #tpu.memory_space<vmem>>, %arg2: memref<2x128xbf16, #tpu.memory_space<vmem>>, %arg3: memref<2x128xf32, #tpu.memory_space<vmem>>) attributes {dimension_semantics = [#tpu.dimension_semantics<parallel>], iteration_bounds = array<i64: 1>, scalar_prefetch = 0 : i64, scratch_operands = 0 : i64, tpu.core_type = #tpu.core_type<tc>, window_params = [{transform_indices = @transform_0, window_bounds = array<i64: 2, 4, 128>}, {transform_indices = @transform_1, window_bounds = array<i64: 2, 128>}, {transform_indices = @transform_2, window_bounds = array<i64: 2, 128>}]} {
    %c0 = arith.constant 0 : index
    %c0_0 = arith.constant 0 : index
    %c0_1 = arith.constant 0 : index
    %0 = vector.load %arg1[%c0, %c0_0, %c0_1] : memref<2x4x128xbf16, #tpu.memory_space<vmem>>, vector<2x4x128xbf16>
    %1 = arith.extf %0 : vector<2x4x128xbf16> to vector<2x4x128xf32>
    %c0_2 = arith.constant 0 : index
    %c0_3 = arith.constant 0 : index
    %2 = vector.load %arg2[%c0_2, %c0_3] : memref<2x128xbf16, #tpu.memory_space<vmem>>, vector<2x128xbf16>
    %3 = arith.extf %2 : vector<2x128xbf16> to vector<2x128xf32>
    %4 = vector.shape_cast %3 : vector<2x128xf32> to vector<2x1x128xf32>
    %5 = vector.broadcast %4 : vector<2x1x128xf32> to vector<2x4x128xf32>
    %6 = arith.mulf %1, %5 : vector<2x4x128xf32>
    %cst = arith.constant dense<0.000000e+00> : vector<2x4xf32>
    %7 = vector.multi_reduction <add>, %6, %cst [2] : vector<2x4x128xf32> to vector<2x4xf32>
    %cst_4 = arith.constant dense<0xFF800000> : vector<2xf32>
    %8 = vector.multi_reduction <maximumf>, %7, %cst_4 [1] : vector<2x4xf32> to vector<2xf32>
    %9 = vector.shape_cast %8 : vector<2xf32> to vector<2x1xf32>
    %10 = vector.broadcast %9 : vector<2x1xf32> to vector<2x4xf32>
    %11 = arith.subf %7, %10 : vector<2x4xf32>
    %12 = math.exp %11 : vector<2x4xf32>
    %13 = vector.shape_cast %12 : vector<2x4xf32> to vector<2x4x1xf32>
    %14 = vector.broadcast %13 : vector<2x4x1xf32> to vector<2x4x128xf32>
    %15 = arith.mulf %1, %14 : vector<2x4x128xf32>
    %cst_5 = arith.constant dense<0.000000e+00> : vector<2x128xf32>
    %16 = vector.multi_reduction <add>, %15, %cst_5 [1] : vector<2x4x128xf32> to vector<2x128xf32>
    %cst_6 = arith.constant dense<0.000000e+00> : vector<2xf32>
    %17 = vector.multi_reduction <add>, %12, %cst_6 [1] : vector<2x4xf32> to vector<2xf32>
    %18 = vector.shape_cast %17 : vector<2xf32> to vector<2x1xf32>
    %19 = tpu.reciprocal %18 {approx = true} : vector<2x1xf32> -> vector<2x1xf32>
    %20 = vector.broadcast %19 : vector<2x1xf32> to vector<2x128xf32>
    %21 = arith.mulf %16, %20 : vector<2x128xf32>
    %c0_7 = arith.constant 0 : index
    %c0_8 = arith.constant 0 : index
    %22 = vector.load %arg3[%c0_7, %c0_8] : memref<2x128xf32, #tpu.memory_space<vmem>>, vector<2x128xf32>
    tpu.vector_store %arg3[%c0_7, %c0_8], %21 {strides = array<i32>} : memref<2x128xf32, #tpu.memory_space<vmem>>, vector<2x128xf32>,
    return
  }
  func.func @transform_0(%arg0: i32) -> (i32, i32, i32) {
    %c0_i32 = arith.constant 0 : i32
    %c0_i32_0 = arith.constant 0 : i32
    %c0_i32_1 = arith.constant 0 : i32
    return %arg0, %c0_i32, %c0_i32_0 : i32, i32, i32
  }
  func.func @transform_1(%arg0: i32) -> (i32, i32) {
    %c0_i32 = arith.constant 0 : i32
    %c0_i32_0 = arith.constant 0 : i32
    return %arg0, %c0_i32 : i32, i32
  }
  func.func @transform_2(%arg0: i32) -> (i32, i32) {
    %c0_i32 = arith.constant 0 : i32
    %c0_i32_0 = arith.constant 0 : i32
    return %arg0, %c0_i32 : i32, i32
  }
}

module attributes {stable_mosaic.version = 11 : i64} {
  func.func @_kcnn_kernel(%arg0: i32, %arg1: memref<64x16xbf16, #tpu.memory_space<vmem>>, %arg2: memref<64x16xbf16, #tpu.memory_space<vmem>>, %arg3: memref<16x16xbf16, #tpu.memory_space<vmem>>, %arg4: memref<1x16xf32, #tpu.memory_space<vmem>>, %arg5: memref<32x8xbf16, #tpu.memory_space<vmem>>, %arg6: memref<1x8xf32, #tpu.memory_space<vmem>>, %arg7: memref<32x16xbf16, #tpu.memory_space<vmem>>, %arg8: memref<1x8xf32, #tpu.memory_space<vmem>>, %arg9: memref<8x128xbf16, #tpu.memory_space<vmem>>) attributes {dimension_semantics = [#tpu.dimension_semantics<parallel>], iteration_bounds = array<i64: 2>, scalar_prefetch = 0 : i64, scratch_operands = 0 : i64, tpu.core_type = #tpu.core_type<tc>, window_params = [{transform_indices = @transform_0, window_bounds = array<i64: 64, 16>}, {transform_indices = @transform_1, window_bounds = array<i64: 64, 16>}, {pipeline_mode = #tpu.pipeline_mode<synchronous>, transform_indices = @transform_2, window_bounds = array<i64: 16, 16>}, {pipeline_mode = #tpu.pipeline_mode<synchronous>, transform_indices = @transform_3, window_bounds = array<i64: 1, 16>}, {pipeline_mode = #tpu.pipeline_mode<synchronous>, transform_indices = @transform_4, window_bounds = array<i64: 32, 8>}, {pipeline_mode = #tpu.pipeline_mode<synchronous>, transform_indices = @transform_5, window_bounds = array<i64: 1, 8>}, {pipeline_mode = #tpu.pipeline_mode<synchronous>, transform_indices = @transform_6, window_bounds = array<i64: 32, 16>}, {pipeline_mode = #tpu.pipeline_mode<synchronous>, transform_indices = @transform_7, window_bounds = array<i64: 1, 8>}, {transform_indices = @transform_8, window_bounds = array<i64: 8, 128>}]} {
    %c0 = arith.constant 0 : index
    %c0_0 = arith.constant 0 : index
    %0 = vector.load %arg2[%c0, %c0_0] : memref<64x16xbf16, #tpu.memory_space<vmem>>, vector<64x16xbf16>
    %c0_1 = arith.constant 0 : index
    %c0_2 = arith.constant 0 : index
    %1 = vector.load %arg3[%c0_1, %c0_2] : memref<16x16xbf16, #tpu.memory_space<vmem>>, vector<16x16xbf16>
    %cst = arith.constant dense<0.000000e+00> : vector<64x16xf32>
    %2 = tpu.matmul %0, %1, %cst {dimension_numbers = #tpu.dot_dimension_numbers<[1], [0], [0], [1], [0, 0, 1, 1], [], []>} : vector<64x16xbf16>, vector<16x16xbf16>, vector<64x16xf32> -> vector<64x16xf32>
    %3 = arith.truncf %2 : vector<64x16xf32> to vector<64x16xbf16>
    %c0_3 = arith.constant 0 : index
    %c0_4 = arith.constant 0 : index
    %4 = vector.load %arg4[%c0_3, %c0_4] : memref<1x16xf32, #tpu.memory_space<vmem>>, vector<1x16xf32>
    %5 = arith.truncf %4 : vector<1x16xf32> to vector<1x16xbf16>
    %6 = vector.broadcast %5 : vector<1x16xbf16> to vector<64x16xbf16>
    %7 = arith.addf %3, %6 : vector<64x16xbf16>
    %8 = math.tanh %7 : vector<64x16xbf16>
    %c0_5 = arith.constant 0 : index
    %c0_6 = arith.constant 0 : index
    %9 = vector.load %arg1[%c0_5, %c0_6] : memref<64x16xbf16, #tpu.memory_space<vmem>>, vector<64x16xbf16>
    %10 = tpu.concatenate %9, %8 in 1 : vector<64x16xbf16>, vector<64x16xbf16> -> vector<64x32xbf16>
    %c0_7 = arith.constant 0 : index
    %c0_8 = arith.constant 0 : index
    %11 = vector.load %arg5[%c0_7, %c0_8] : memref<32x8xbf16, #tpu.memory_space<vmem>>, vector<32x8xbf16>
    %cst_9 = arith.constant dense<0.000000e+00> : vector<64x8xf32>
    %12 = tpu.matmul %10, %11, %cst_9 {dimension_numbers = #tpu.dot_dimension_numbers<[1], [0], [0], [1], [0, 0, 1, 1], [], []>} : vector<64x32xbf16>, vector<32x8xbf16>, vector<64x8xf32> -> vector<64x8xf32>
    %13 = vector.shape_cast %12 : vector<64x8xf32> to vector<8x8x1x8xf32>
    %14 = vector.shape_cast %13 : vector<8x8x1x8xf32> to vector<8x8x8xf32>
    %15 = arith.truncf %14 : vector<8x8x8xf32> to vector<8x8x8xbf16>
    %c0_10 = arith.constant 0 : index
    %c0_11 = arith.constant 0 : index
    %16 = vector.load %arg6[%c0_10, %c0_11] : memref<1x8xf32, #tpu.memory_space<vmem>>, vector<1x8xf32>
    %17 = arith.truncf %16 : vector<1x8xf32> to vector<1x8xbf16>
    %18 = vector.shape_cast %17 : vector<1x8xbf16> to vector<1x1x8xbf16>
    %19 = vector.broadcast %18 : vector<1x1x8xbf16> to vector<8x8x8xbf16>
    %20 = arith.addf %15, %19 : vector<8x8x8xbf16>
    %cst_12 = arith.constant 0.000000e+00 : bf16
    %21 = vector.broadcast %cst_12 : bf16 to vector<8x8x8xbf16>
    %22 = arith.maximumf %20, %21 : vector<8x8x8xbf16>
    %cst_13 = arith.constant dense<0xFF80> : vector<8x8xbf16>
    %23 = vector.multi_reduction <maximumf>, %22, %cst_13 [1] : vector<8x8x8xbf16> to vector<8x8xbf16>
    %c0_14 = arith.constant 0 : index
    %c0_15 = arith.constant 0 : index
    %24 = vector.load %arg7[%c0_14, %c0_15] : memref<32x16xbf16, #tpu.memory_space<vmem>>, vector<32x16xbf16>
    %cst_16 = arith.constant dense<0.000000e+00> : vector<64x16xf32>
    %25 = tpu.matmul %10, %24, %cst_16 {dimension_numbers = #tpu.dot_dimension_numbers<[1], [0], [0], [1], [0, 0, 1, 1], [], []>} : vector<64x32xbf16>, vector<32x16xbf16>, vector<64x16xf32> -> vector<64x16xf32>
    %26 = vector.shape_cast %25 : vector<64x16xf32> to vector<8x8x2x8xf32>
    %27 = vector.extract_strided_slice %26 {offsets = [0, 0, 0, 0], sizes = [8, 7, 1, 8], strides = [1, 1, 1, 1]} : vector<8x8x2x8xf32> to vector<8x7x1x8xf32>
    %28 = vector.shape_cast %27 : vector<8x7x1x8xf32> to vector<8x7x8xf32>
    %29 = vector.extract_strided_slice %26 {offsets = [0, 1, 1, 0], sizes = [8, 7, 1, 8], strides = [1, 1, 1, 1]} : vector<8x8x2x8xf32> to vector<8x7x1x8xf32>
    %30 = vector.shape_cast %29 : vector<8x7x1x8xf32> to vector<8x7x8xf32>
    %31 = arith.addf %28, %30 : vector<8x7x8xf32>
    %32 = arith.truncf %31 : vector<8x7x8xf32> to vector<8x7x8xbf16>
    %c0_17 = arith.constant 0 : index
    %c0_18 = arith.constant 0 : index
    %33 = vector.load %arg8[%c0_17, %c0_18] : memref<1x8xf32, #tpu.memory_space<vmem>>, vector<1x8xf32>
    %34 = arith.truncf %33 : vector<1x8xf32> to vector<1x8xbf16>
    %35 = vector.shape_cast %34 : vector<1x8xbf16> to vector<1x1x8xbf16>
    %36 = vector.broadcast %35 : vector<1x1x8xbf16> to vector<8x7x8xbf16>
    %37 = arith.addf %32, %36 : vector<8x7x8xbf16>
    %cst_19 = arith.constant 0.000000e+00 : bf16
    %38 = vector.broadcast %cst_19 : bf16 to vector<8x7x8xbf16>
    %39 = arith.maximumf %37, %38 : vector<8x7x8xbf16>
    %cst_20 = arith.constant dense<0xFF80> : vector<8x8xbf16>
    %40 = vector.multi_reduction <maximumf>, %39, %cst_20 [1] : vector<8x7x8xbf16> to vector<8x8xbf16>
    %cst_21 = arith.constant 0.000000e+00 : bf16
    %41 = vector.broadcast %cst_21 : bf16 to vector<8x112xbf16>
    %42 = tpu.concatenate %23, %40, %41 in 1 : vector<8x8xbf16>, vector<8x8xbf16>, vector<8x112xbf16> -> vector<8x128xbf16>
    %c0_22 = arith.constant 0 : index
    %c0_23 = arith.constant 0 : index
    %43 = vector.load %arg9[%c0_22, %c0_23] : memref<8x128xbf16, #tpu.memory_space<vmem>>, vector<8x128xbf16>
    tpu.vector_store %arg9[%c0_22, %c0_23], %42 {strides = array<i32>} : memref<8x128xbf16, #tpu.memory_space<vmem>>, vector<8x128xbf16>,
    return
  }
  func.func @transform_0(%arg0: i32) -> (i32, i32) {
    %c0_i32 = arith.constant 0 : i32
    %c0_i32_0 = arith.constant 0 : i32
    return %arg0, %c0_i32 : i32, i32
  }
  func.func @transform_1(%arg0: i32) -> (i32, i32) {
    %c0_i32 = arith.constant 0 : i32
    %c0_i32_0 = arith.constant 0 : i32
    return %arg0, %c0_i32 : i32, i32
  }
  func.func @transform_2(%arg0: i32) -> (i32, i32) {
    %c0_i32 = arith.constant 0 : i32
    %c0_i32_0 = arith.constant 0 : i32
    %c0_i32_1 = arith.constant 0 : i32
    return %c0_i32, %c0_i32_0 : i32, i32
  }
  func.func @transform_3(%arg0: i32) -> (i32, i32) {
    %c0_i32 = arith.constant 0 : i32
    %c0_i32_0 = arith.constant 0 : i32
    %c0_i32_1 = arith.constant 0 : i32
    return %c0_i32, %c0_i32_0 : i32, i32
  }
  func.func @transform_4(%arg0: i32) -> (i32, i32) {
    %c0_i32 = arith.constant 0 : i32
    %c0_i32_0 = arith.constant 0 : i32
    %c0_i32_1 = arith.constant 0 : i32
    return %c0_i32, %c0_i32_0 : i32, i32
  }
  func.func @transform_5(%arg0: i32) -> (i32, i32) {
    %c0_i32 = arith.constant 0 : i32
    %c0_i32_0 = arith.constant 0 : i32
    %c0_i32_1 = arith.constant 0 : i32
    return %c0_i32, %c0_i32_0 : i32, i32
  }
  func.func @transform_6(%arg0: i32) -> (i32, i32) {
    %c0_i32 = arith.constant 0 : i32
    %c0_i32_0 = arith.constant 0 : i32
    %c0_i32_1 = arith.constant 0 : i32
    return %c0_i32, %c0_i32_0 : i32, i32
  }
  func.func @transform_7(%arg0: i32) -> (i32, i32) {
    %c0_i32 = arith.constant 0 : i32
    %c0_i32_0 = arith.constant 0 : i32
    %c0_i32_1 = arith.constant 0 : i32
    return %c0_i32, %c0_i32_0 : i32, i32
  }
  func.func @transform_8(%arg0: i32) -> (i32, i32) {
    %c0_i32 = arith.constant 0 : i32
    %c0_i32_0 = arith.constant 0 : i32
    return %arg0, %c0_i32 : i32, i32
  }
}

</mosaic_0001>

<llo_original>
// kernel: attention_model_forward.3
$region0: #{attention_model_forward.3}
  #allocation0 [shape = 'u32[]', space=smem, size = 0x4, offset = 0x4, fixed_abs, tag = 'smem constant byte address 0x4 - core index']
  #allocation1 [shape = 'u32[144,128]{1,0:T(1,128)}', space=vmem, size = 0x12000, scoped, tag = 'internal scratch']
  %s0 = inlined_call_operand.vmem [shape: bf16[2,4,128], index: 0, kind: input, shape index: {}]
  %s1 = inlined_call_operand.vmem [shape: bf16[2,128], index: 1, kind: input, shape index: {}]
  %s2 = inlined_call_operand.hbm [shape: f32[2,128], index: 2, kind: output, shape index: {}]
  %s3 = sld [smem:[#allocation0]]
  $region18: #{attention_model_forward.3} parent=0
    _
  %s5 = ssub.s32 1, %s3
  %s6 = scalar_select 0, %s5, %s3
  $region1: #{attention_model_forward.3} parent=0
    #allocation2 [shape = 'u8[1024]{0}', space=vmem, size = 0x400, scoped, tag = 'output window, operand 0, single buffered']
    #allocation3 [shape = 's32[1]{0}', space=sflag, size = 0x4, scoped, tag = 'scoped memory for attention_model_forward.3']
    %7 = vsyncpa [#allocation3], 0
    // Predicated region
    $region2: #{attention_model_forward.3} parent=1 // pred_check
      _
    $region3: #{attention_model_forward.3} parent=1 // pred_check_branch
      %9 = sbr.rel (0) target = $region5
    $region4: #{attention_model_forward.3} parent=1 // pred_region
      _
    $region5: #{attention_model_forward.3} parent=1 // pred_fallthru
      _
    // Predicated region
    $region6: #{attention_model_forward.3} parent=1 // pred_check
      _
    $region7: #{attention_model_forward.3} parent=1 // pred_check_branch
      %11 = sbr.rel (0) target = $region9
    $region8: #{attention_model_forward.3} parent=1 // pred_region
      _
    $region9: #{attention_model_forward.3} parent=1 // pred_fallthru
      _
    %v12 = vld [vmem:[%s0] sm:$0x3]
    %v13 = vld [vmem:[%s0 + $0x2] sm:$0x3]
    %v14 = vunpack.c.l.bf16 %v12
    %v15 = vunpack.c.l.bf16 %v13
    %v16 = vld [vmem:[%s1] sm:$0x1]
    %v17 = vunpack.c.l.bf16 %v16
    %v20 = vunpack.c.l.s4 1966171168
    %v21 = vunpack.c.0.s8 %v20
    %v22 = vlaneseq
    %v23 = vshrl.u32 %v22, 7
    %v24 = vsub.s32 %v21, %v23
    %v25 = vrot.slane %v17, %v24
    %v26 = vcombine.high %v25, %v25
    %v27 = vlaneseq
    %v28 = vshrl.u32 %v27, 7
    %v29 = vsub.s32 0, %v28
    %v30 = vrot.slane %v25, %v29
    %v31 = vlaneseq
    %v32 = vshrl.u32 %v31, 7
    %v33 = vsub.s32 0, %v32
    %v34 = vrot.slane %v26, %v33
    %v37 = vmul.f32 %v14, %v30
    %v38 = vmul.f32 %v15, %v34
    %vm39 = vcmask 1043456
    %v40 = vsel %vm39, %v37, 0.0
    %41 = vadd.xlane.f32.xlu0 %v40
    %v42 = vpop.xlane.xlu0 %41
    %v43 = vsel %vm39, %v38, 0.0
    %44 = vadd.xlane.f32.xlu0 %v43
    %v45 = vpop.xlane.xlu0 %44
    %v48 = vlaneseq
    %v49 = vand.u32 %v48, 127
    %v50 = vlaneseq
    %v51 = vshrl.u32 %v50, 7
    %v52 = vsub.s32 %v49, %v51
    %v53 = vrot.slane %v42, %v52
    %v54 = vlaneseq
    %v55 = vshrl.u32 %v54, 7
    %v56 = vsub.s32 %v49, %v55
    %v57 = vrot.slane %v45, %v56
    %vm58 = vcmask 1041409
    %v59 = vsel %vm58, %v57, %v53
    %vm61 = vcmask 25600
    %v62 = vsel %vm61, %v59, -inf
    %63 = vmax.xlane.f32.xlu0 %v62
    %v64 = vpop.xlane.xlu0 %63
    %v66 = vlaneseq
    %v67 = vshrl.u32 %v66, 7
    %v68 = vsub.s32 0, %v67
    %v69 = vrot.slane %v64, %v68
    %v70 = vlaneseq
    %v71 = vshrl.u32 %v70, 7
    %v72 = vsub.s32 1, %v71
    %v73 = vrot.slane %v64, %v72
    %v76 = vsub.f32 %v42, %v69
    %v77 = vsub.f32 %v45, %v73
    %v78 = vmul.f32 %v76, 1.442695
    %v79 = vpow.pop %v78
    %v80 = vmul.f32 %v77, 1.442695
    %v81 = vpow.pop %v80
    %83 = vset.pattern.permute.xlu0 0
    %84 = vperm.xlu0 %83, %v79
    %v85 = vpop.permute.xlu0 %84
    %88 = vset.pattern.permute.xlu0 0
    %89 = vperm.xlu0 %88, %v81
    %v90 = vpop.permute.xlu0 %89
    %v92 = vmul.f32 %v14, %v85
    %v93 = vmul.f32 %v15, %v90
    %v94 = vsel %vm39, %v92, 0.0
    %v95 = vrot.slane %v94, 4
    %v96 = vadd.f32 %v94, %v95
    %v97 = vrot.slane %v96, 2
    %v98 = vadd.f32 %v96, %v97
    %v99 = vrot.slane %v98, 1
    %v100 = vadd.f32 %v98, %v99
    %v101 = vsel %vm39, %v93, 0.0
    %v102 = vrot.slane %v101, 4
    %v103 = vadd.f32 %v101, %v102
    %v104 = vrot.slane %v103, 2
    %v105 = vadd.f32 %v103, %v104
    %v106 = vrot.slane %v105, 1
    %v107 = vadd.f32 %v105, %v106
    %v108 = vlaneseq
    %v109 = vshrl.u32 %v108, 7
    %v110 = vsub.s32 %v49, %v109
    %v111 = vrot.slane %v85, %v110
    %v112 = vlaneseq
    %v113 = vshrl.u32 %v112, 7
    %v114 = vsub.s32 %v49, %v113
    %v115 = vrot.slane %v90, %v114
    %v116 = vsel %vm58, %v115, %v111
    %v118 = vsel %vm61, %v116, 0.0
    %119 = vadd.xlane.f32.xlu0 %v118
    %v120 = vpop.xlane.xlu0 %119
    %v121 = vrcp.pop %v120
    %v123 = vrot.slane %v121, 1
    %v126 = vmul.f32 %v100, %v121
    %v127 = vmul.f32 %v107, %v123
    %v130 = vrot.slane %v127, 7
    %v131 = vsel %vm58, %v130, %v126
    %133 = vst [vmem:[#allocation2] sm:$0x3] %v131
    // Predicated region
    $region10: #{attention_model_forward.3} parent=1 // pred_check
      _
    $region11: #{attention_model_forward.3} parent=1 // pred_check_branch
      %135 = sbr.rel (0) target = $region13
    $region12: #{attention_model_forward.3} parent=1 // pred_region
      %s137 = ssub.s32 32, 32
      %138 = vsyncadd [#allocation3], %s137
      %s140 = sshll.u32 [#allocation2], 4
      %s141 = int_to_ptr.vmem [resolvable:$true] %s140
      %143 = dma.vmem_to_hbm [thread:$0]  %s141, 32, %s2, [#allocation3]
    $region13: #{attention_model_forward.3} parent=1 // pred_fallthru
      _
    // Predicated region
    $region14: #{attention_model_forward.3} parent=1 // pred_check
      _
    $region15: #{attention_model_forward.3} parent=1 // pred_check_branch
      %145 = sbr.rel (0) target = $region17
    $region16: #{attention_model_forward.3} parent=1 // pred_region
      %146 = dma.done [#allocation3], 32
    $region17: #{attention_model_forward.3} parent=1 // pred_fallthru
      _
    %147 = vsyncpa [#allocation3], 1

// kernel: attention_model_forward.2
$region0: #{attention_model_forward.2}
  #allocation0 [shape = 'u32[]', space=smem, size = 0x4, offset = 0x4, fixed_abs, tag = 'smem constant byte address 0x4 - core index']
  #allocation1 [shape = 'u32[144,128]{1,0:T(1,128)}', space=vmem, size = 0x12000, scoped, tag = 'internal scratch']
  %s0 = inlined_call_operand.vmem [shape: bf16[128,16], index: 0, kind: input, shape index: {}]
  %s1 = inlined_call_operand.vmem [shape: bf16[128,16], index: 1, kind: input, shape index: {}]
  %s2 = inlined_call_operand.vmem [shape: bf16[16,16], index: 2, kind: input, shape index: {}]
  %s3 = inlined_call_operand.vmem [shape: f32[1,16], index: 3, kind: input, shape index: {}]
  %s4 = inlined_call_operand.vmem [shape: bf16[32,8], index: 4, kind: input, shape index: {}]
  %s5 = inlined_call_operand.vmem [shape: f32[1,8], index: 5, kind: input, shape index: {}]
  %s6 = inlined_call_operand.vmem [shape: bf16[32,16], index: 6, kind: input, shape index: {}]
  %s7 = inlined_call_operand.vmem [shape: f32[1,8], index: 7, kind: input, shape index: {}]
  %s8 = inlined_call_operand.vmem [shape: bf16[16,128], index: 8, kind: output, shape index: {}]
  %s9 = sld [smem:[#allocation0]]
  $region65: #{attention_model_forward.2} parent=0
    _
  %s11 = ssub.s32 1, %s9
  %s12 = scalar_select 0, %s11, %s9
  loop: start=0, step=1, limit=4
  $region2: #{attention_model_forward.2} parent=0 // loop_pre_header
    _
  $region3: #{attention_model_forward.2} parent=0 // loop_header
    %s14 = sphi 0, %s18
    %p15 = scmp.ge.s32.totalorder %s14, 4
    %s24 = sphi 0, %s26
    %s27 = sphi 0, %s24
    %s28 = sphi 0, %s27
    %s44 = sphi 0, %s28
    %s50 = sphi 0, %s52
    %s53 = sphi 0, %s50
    %s54 = sphi 0, %s53
    %s70 = sphi 0, %s54
    %s74 = sphi 0, %s74
    %s76 = sphi 0, %s74
    %s77 = sphi 0, %s76
    %s91 = sphi 0, %s77
    %s95 = sphi 0, %s95
    %s97 = sphi 0, %s95
    %s98 = sphi 0, %s97
    %s112 = sphi 0, %s98
    %s116 = sphi 0, %s116
    %s118 = sphi 0, %s116
    %s119 = sphi 0, %s118
    %s133 = sphi 0, %s119
    %s137 = sphi 0, %s137
    %s139 = sphi 0, %s137
    %s140 = sphi 0, %s139
    %s154 = sphi 0, %s140
    %s158 = sphi 0, %s158
    %s160 = sphi 0, %s158
    %s161 = sphi 0, %s160
    %s175 = sphi 0, %s161
    %s179 = sphi 0, %s179
    %s181 = sphi 0, %s179
    %s182 = sphi 0, %s181
    %s196 = sphi 0, %s182
    %s202 = sphi 0, %s204
    %s205 = sphi 0, %s202
    %s206 = sphi 0, %s205
    %s222 = sphi 0, %s206
  $region4: #{attention_model_forward.2} parent=0 // loop_header_branch
    %17 = sbr.rel (%p15) target = $region8
  $region5: #{attention_model_forward.2} parent=0 // loop_body
    %s19 = ssub.s32 %s14, 1
    %s20 = ssub.s32 %s14, 2
    %s21 = sadd.s32 %s14, 1
    %s22 = ssub.s32 %s14, %s21
    %p23 = scmp.eq.s32.totalorder %s22, 0
    %s25 = sadd.s32 %s24, 1
    %s26 = scalar_select %p23, %s24, %s25
    %p29 = pneg %p23
    %p30 = scmp.eq.s32.totalorder %s14, 1
    %p31 = por %p29, %p30
    %p32 = scmp.ne.s32.totalorder %s24, %s27
    %p33 = scmp.eq.s32.totalorder %s14, 0
    %p34 = por %p32, %p33
    %p35 = scmp.ne.s32.totalorder %s24, %s27
    %p36 = scmp.eq.s32.totalorder %s19, 1
    %p37 = por %p35, %p36
    %p38 = scmp.ne.s32.totalorder %s27, %s28
    %p39 = scmp.eq.s32.totalorder %s19, 0
    %p40 = por %p38, %p39
    %p41 = scmp.ne.s32.totalorder %s27, %s28
    %p42 = scmp.eq.s32.totalorder %s20, 1
    %p43 = por %p41, %p42
    %p45 = scmp.ne.s32.totalorder %s28, %s44
    %p46 = scmp.eq.s32.totalorder %s20, 0
    %p47 = por %p45, %p46
    %s48 = ssub.s32 %s14, %s21
    %p49 = scmp.eq.s32.totalorder %s48, 0
    %s51 = sadd.s32 %s50, 1
    %s52 = scalar_select %p49, %s50, %s51
    %p55 = pneg %p49
    %p56 = scmp.eq.s32.totalorder %s14, 1
    %p57 = por %p55, %p56
    %p58 = scmp.ne.s32.totalorder %s50, %s53
    %p59 = scmp.eq.s32.totalorder %s14, 0
    %p60 = por %p58, %p59
    %p61 = scmp.ne.s32.totalorder %s50, %s53
    %p62 = scmp.eq.s32.totalorder %s19, 1
    %p63 = por %p61, %p62
    %p64 = scmp.ne.s32.totalorder %s53, %s54
    %p65 = scmp.eq.s32.totalorder %s19, 0
    %p66 = por %p64, %p65
    %p67 = scmp.ne.s32.totalorder %s53, %s54
    %p68 = scmp.eq.s32.totalorder %s20, 1
    %p69 = por %p67, %p68
    %p71 = scmp.ne.s32.totalorder %s54, %s70
    %p72 = scmp.eq.s32.totalorder %s20, 0
    %p73 = por %p71, %p72
    %s75 = sadd.s32 %s74, 1
    %p78 = scmp.eq.s32.totalorder %s14, 1
    %p79 = scmp.ne.s32.totalorder %s74, %s76
    %p80 = scmp.eq.s32.totalorder %s14, 0
    %p81 = por %p79, %p80
    %p82 = scmp.ne.s32.totalorder %s74, %s76
    %p83 = scmp.eq.s32.totalorder %s19, 1
    %p84 = por %p82, %p83
    %p85 = scmp.ne.s32.totalorder %s76, %s77
    %p86 = scmp.eq.s32.totalorder %s19, 0
    %p87 = por %p85, %p86
    %p88 = scmp.ne.s32.totalorder %s76, %s77
    %p89 = scmp.eq.s32.totalorder %s20, 1
    %p90 = por %p88, %p89
    %p92 = scmp.ne.s32.totalorder %s77, %s91
    %p93 = scmp.eq.s32.totalorder %s20, 0
    %p94 = por %p92, %p93
    %s96 = sadd.s32 %s95, 1
    %p99 = scmp.eq.s32.totalorder %s14, 1
    %p100 = scmp.ne.s32.totalorder %s95, %s97
    %p101 = scmp.eq.s32.totalorder %s14, 0
    %p102 = por %p100, %p101
    %p103 = scmp.ne.s32.totalorder %s95, %s97
    %p104 = scmp.eq.s32.totalorder %s19, 1
    %p105 = por %p103, %p104
    %p106 = scmp.ne.s32.totalorder %s97, %s98
    %p107 = scmp.eq.s32.totalorder %s19, 0
    %p108 = por %p106, %p107
    %p109 = scmp.ne.s32.totalorder %s97, %s98
    %p110 = scmp.eq.s32.totalorder %s20, 1
    %p111 = por %p109, %p110
    %p113 = scmp.ne.s32.totalorder %s98, %s112
    %p114 = scmp.eq.s32.totalorder %s20, 0
    %p115 = por %p113, %p114
    %s117 = sadd.s32 %s116, 1
    %p120 = scmp.eq.s32.totalorder %s14, 1
    %p121 = scmp.ne.s32.totalorder %s116, %s118
    %p122 = scmp.eq.s32.totalorder %s14, 0
    %p123 = por %p121, %p122
    %p124 = scmp.ne.s32.totalorder %s116, %s118
    %p125 = scmp.eq.s32.totalorder %s19, 1
    %p126 = por %p124, %p125
    %p127 = scmp.ne.s32.totalorder %s118, %s119
    %p128 = scmp.eq.s32.totalorder %s19, 0
    %p129 = por %p127, %p128
    %p130 = scmp.ne.s32.totalorder %s118, %s119
    %p131 = scmp.eq.s32.totalorder %s20, 1
    %p132 = por %p130, %p131
    %p134 = scmp.ne.s32.totalorder %s119, %s133
    %p135 = scmp.eq.s32.totalorder %s20, 0
    %p136 = por %p134, %p135
    %s138 = sadd.s32 %s137, 1
    %p141 = scmp.eq.s32.totalorder %s14, 1
    %p142 = scmp.ne.s32.totalorder %s137, %s139
    %p143 = scmp.eq.s32.totalorder %s14, 0
    %p144 = por %p142, %p143
    %p145 = scmp.ne.s32.totalorder %s137, %s139
    %p146 = scmp.eq.s32.totalorder %s19, 1
    %p147 = por %p145, %p146
    %p148 = scmp.ne.s32.totalorder %s139, %s140
    %p149 = scmp.eq.s32.totalorder %s19, 0
    %p150 = por %p148, %p149
    %p151 = scmp.ne.s32.totalorder %s139, %s140
    %p152 = scmp.eq.s32.totalorder %s20, 1
    %p153 = por %p151, %p152
    %p155 = scmp.ne.s32.totalorder %s140, %s154
    %p156 = scmp.eq.s32.totalorder %s20, 0
    %p157 = por %p155, %p156
    %s159 = sadd.s32 %s158, 1
    %p162 = scmp.eq.s32.totalorder %s14, 1
    %p163 = scmp.ne.s32.totalorder %s158, %s160
    %p164 = scmp.eq.s32.totalorder %s14, 0
    %p165 = por %p163, %p164
    %p166 = scmp.ne.s32.totalorder %s158, %s160
    %p167 = scmp.eq.s32.totalorder %s19, 1
    %p168 = por %p166, %p167
    %p169 = scmp.ne.s32.totalorder %s160, %s161
    %p170 = scmp.eq.s32.totalorder %s19, 0
    %p171 = por %p169, %p170
    %p172 = scmp.ne.s32.totalorder %s160, %s161
    %p173 = scmp.eq.s32.totalorder %s20, 1
    %p174 = por %p172, %p173
    %p176 = scmp.ne.s32.totalorder %s161, %s175
    %p177 = scmp.eq.s32.totalorder %s20, 0
    %p178 = por %p176, %p177
    %s180 = sadd.s32 %s179, 1
    %p183 = scmp.eq.s32.totalorder %s14, 1
    %p184 = scmp.ne.s32.totalorder %s179, %s181
    %p185 = scmp.eq.s32.totalorder %s14, 0
    %p186 = por %p184, %p185
    %p187 = scmp.ne.s32.totalorder %s179, %s181
    %p188 = scmp.eq.s32.totalorder %s19, 1
    %p189 = por %p187, %p188
    %p190 = scmp.ne.s32.totalorder %s181, %s182
    %p191 = scmp.eq.s32.totalorder %s19, 0
    %p192 = por %p190, %p191
    %p193 = scmp.ne.s32.totalorder %s181, %s182
    %p194 = scmp.eq.s32.totalorder %s20, 1
    %p195 = por %p193, %p194
    %p197 = scmp.ne.s32.totalorder %s182, %s196
    %p198 = scmp.eq.s32.totalorder %s20, 0
    %p199 = por %p197, %p198
    %s200 = ssub.s32 %s14, %s21
    %p201 = scmp.eq.s32.totalorder %s200, 0
    %s203 = sadd.s32 %s202, 1
    %s204 = scalar_select %p201, %s202, %s203
    %p207 = pneg %p201
    %p208 = scmp.eq.s32.totalorder %s14, 1
    %p209 = por %p207, %p208
    %p210 = scmp.ne.s32.totalorder %s202, %s205
    %p211 = scmp.eq.s32.totalorder %s14, 0
    %p212 = por %p210, %p211
    %p213 = scmp.ne.s32.totalorder %s202, %s205
    %p214 = scmp.eq.s32.totalorder %s19, 1
    %p215 = por %p213, %p214
    %p216 = scmp.ne.s32.totalorder %s205, %s206
    %p217 = scmp.eq.s32.totalorder %s19, 0
    %p218 = por %p216, %p217
    %p219 = scmp.ne.s32.totalorder %s205, %s206
    %p220 = scmp.eq.s32.totalorder %s20, 1
    %p221 = por %p219, %p220
    %p223 = scmp.ne.s32.totalorder %s206, %s222
    %p224 = scmp.eq.s32.totalorder %s20, 0
    %p225 = por %p223, %p224
    %p226 = scmp.le.s32.totalorder 1, %s14
    %p227 = scmp.lt.s32.totalorder %s14, 3
    %p228 = pnand %p226, %p227
    %p229 = pneg %p228
    // Predicated region
    $region9: #{attention_model_forward.2} parent=5 // pred_check
      _
    $region10: #{attention_model_forward.2} parent=5 // pred_check_branch
      %231 = sbr.rel (%p228) target = $region12
    $region11: #{attention_model_forward.2} parent=5 // pred_region
      %s232 = ssub.s32 %s14, 1
      // Predicated region
      $region13: #{attention_model_forward.2} parent=11 // pred_check
        %p233 = pneg %p87
      $region14: #{attention_model_forward.2} parent=11 // pred_check_branch
        %235 = sbr.rel (%p233) target = $region16
      $region15: #{attention_model_forward.2} parent=11 // pred_region
        _
      $region16: #{attention_model_forward.2} parent=11 // pred_fallthru
        _
      // Predicated region
      $region17: #{attention_model_forward.2} parent=11 // pred_check
        %p236 = pneg %p108
      $region18: #{attention_model_forward.2} parent=11 // pred_check_branch
        %238 = sbr.rel (%p236) target = $region20
      $region19: #{attention_model_forward.2} parent=11 // pred_region
        _
      $region20: #{attention_model_forward.2} parent=11 // pred_fallthru
        _
      // Predicated region
      $region21: #{attention_model_forward.2} parent=11 // pred_check
        %p239 = pneg %p129
      $region22: #{attention_model_forward.2} parent=11 // pred_check_branch
        %241 = sbr.rel (%p239) target = $region24
      $region23: #{attention_model_forward.2} parent=11 // pred_region
        _
      $region24: #{attention_model_forward.2} parent=11 // pred_fallthru
        _
      // Predicated region
      $region25: #{attention_model_forward.2} parent=11 // pred_check
        %p242 = pneg %p150
      $region26: #{attention_model_forward.2} parent=11 // pred_check_branch
        %244 = sbr.rel (%p242) target = $region28
      $region27: #{attention_model_forward.2} parent=11 // pred_region
        _
      $region28: #{attention_model_forward.2} parent=11 // pred_fallthru
        _
      // Predicated region
      $region29: #{attention_model_forward.2} parent=11 // pred_check
        %p245 = pneg %p171
      $region30: #{attention_model_forward.2} parent=11 // pred_check_branch
        %247 = sbr.rel (%p245) target = $region32
      $region31: #{attention_model_forward.2} parent=11 // pred_region
        _
      $region32: #{attention_model_forward.2} parent=11 // pred_fallthru
        _
      // Predicated region
      $region33: #{attention_model_forward.2} parent=11 // pred_check
        %p248 = pneg %p192
      $region34: #{attention_model_forward.2} parent=11 // pred_check_branch
        %250 = sbr.rel (%p248) target = $region36
      $region35: #{attention_model_forward.2} parent=11 // pred_region
        _
      $region36: #{attention_model_forward.2} parent=11 // pred_fallthru
        _
    $region12: #{attention_model_forward.2} parent=5 // pred_fallthru
      _
    %p251 = scmp.lt.s32.totalorder %s14, 2
    // Predicated region
    $region37: #{attention_model_forward.2} parent=5 // pred_check
      %p252 = pneg %p251
    $region38: #{attention_model_forward.2} parent=5 // pred_check_branch
      %254 = sbr.rel (%p252) target = $region40
    $region39: #{attention_model_forward.2} parent=5 // pred_region
      // Predicated region
      $region41: #{attention_model_forward.2} parent=39 // pred_check
        %p255 = pneg %p34
      $region42: #{attention_model_forward.2} parent=39 // pred_check_branch
        %257 = sbr.rel (%p255) target = $region44
      $region43: #{attention_model_forward.2} parent=39 // pred_region
        %s258 = smul.u32 8, %s14
        %p259 = scmp.lt.s32.totalorder %s258, 15
        %s260 = scalar_select %p259, %s258, 15
        %s261 = smul.addr %s260, 4
        %s262 = scalar_lea.vmem %s0, %s261
        %s263 = smul.u32 8, %s14
      $region44: #{attention_model_forward.2} parent=39 // pred_fallthru
        _
      // Predicated region
      $region45: #{attention_model_forward.2} parent=39 // pred_check
        %p264 = pneg %p60
      $region46: #{attention_model_forward.2} parent=39 // pred_check_branch
        %266 = sbr.rel (%p264) target = $region48
      $region47: #{attention_model_forward.2} parent=39 // pred_region
        %s267 = smul.u32 8, %s14
        %p268 = scmp.lt.s32.totalorder %s267, 15
        %s269 = scalar_select %p268, %s267, 15
        %s270 = smul.addr %s269, 4
        %s271 = scalar_lea.vmem %s1, %s270
        %s272 = smul.u32 8, %s14
      $region48: #{attention_model_forward.2} parent=39 // pred_fallthru
        _
    $region40: #{attention_model_forward.2} parent=5 // pred_fallthru
      _
    %p273 = scmp.le.s32.totalorder 1, %s14
    %p274 = scmp.lt.s32.totalorder %s14, 3
    %p275 = pnand %p273, %p274
    %p276 = pneg %p275
    // Predicated region
    $region49: #{attention_model_forward.2} parent=5 // pred_check
      _
    $region50: #{attention_model_forward.2} parent=5 // pred_check_branch
      %278 = sbr.rel (%p275) target = $region52
    $region51: #{attention_model_forward.2} parent=5 // pred_region
      %s279 = ssub.s32 %s14, 1
      %s280 = smul.u32 8, %s19
      %p281 = scmp.lt.s32.totalorder %s280, 15
      %s282 = scalar_select %p281, %s280, 15
      %s283 = smul.addr %s282, 4
      %s284 = scalar_lea.vmem %s0, %s283
      %p285 = pneg %p40
      %p286 = pneg %p37
      %s287 = smul.u32 8, %s19
      %p288 = scmp.lt.s32.totalorder %s287, 15
      %s289 = scalar_select %p288, %s287, 15
      %s290 = smul.addr %s289, 4
      %s291 = scalar_lea.vmem %s1, %s290
      %p292 = pneg %p66
      %p293 = pneg %p63
      %p294 = pneg %p87
      %p295 = pneg %p84
      %p296 = pneg %p108
      %p297 = pneg %p105
      %p298 = pneg %p129
      %p299 = pneg %p126
      %p300 = pneg %p150
      %p301 = pneg %p147
      %p302 = pneg %p171
      %p303 = pneg %p168
      %p304 = pneg %p192
      %p305 = pneg %p189
      %p306 = pneg %p218
      %p307 = pneg %p215
      %p308 = scmp.lt.s32.totalorder %s19, 1
      %s309 = scalar_select %p308, %s19, 1
      %s310 = smul.addr %s309, 4
      %s311 = scalar_lea.vmem %s8, %s310
      %s312 = smul.u32 8, %s19
      %p313 = scmp.lt.s32.totalorder %s312, 15
      %s314 = scalar_select %p313, %s312, 15
      %s315 = smul.addr %s314, 4
      %s316 = scalar_lea.vmem %s0, %s315
      %s317 = smul.u32 8, %s19
      %s318 = smul.u32 8, %s19
      %p319 = scmp.lt.s32.totalorder %s318, 15
      %s320 = scalar_select %p319, %s318, 15
      %s321 = smul.addr %s320, 4
      %s322 = scalar_lea.vmem %s1, %s321
      %s323 = smul.u32 8, %s19
      %p324 = scmp.lt.s32.totalorder %s19, 1
      %s325 = scalar_select %p324, %s19, 1
      %s326 = smul.addr %s325, 4
      %s327 = scalar_lea.vmem %s8, %s326
      %v330 = vld [vmem:[%s322] sm:$0xf]
      %v331 = vld [vmem:[%s322 + $0x4] sm:$0xf]
      %v332 = vld [vmem:[%s322 + $0x8] sm:$0xf]
      %v333 = vld [vmem:[%s322 + $0xc] sm:$0xf]
      %v334 = vld [vmem:[%s322 + $0x10] sm:$0xf]
      %v335 = vld [vmem:[%s322 + $0x14] sm:$0xf]
      %v336 = vld [vmem:[%s322 + $0x18] sm:$0xf]
      %v337 = vld [vmem:[%s322 + $0x1c] sm:$0xf]
      %v338 = vld [vmem:[%s2] sm:$0xf]
      %v339 = vld [vmem:[%s2 + $0x4] sm:$0xf]
      %v348 = vunpack.c.l.b16 %v330
      %v349 = vunpack.c.l.b16 %v331
      %v350 = vunpack.c.l.b16 %v332
      %v351 = vunpack.c.l.b16 %v333
      %v352 = vunpack.c.l.b16 %v334
      %v353 = vunpack.c.l.b16 %v335
      %v354 = vunpack.c.l.b16 %v336
      %v355 = vunpack.c.l.b16 %v337
      %v356 = vpack.c.b16 %v349, %v348
      %v357 = vpack.c.b16 %v351, %v350
      %v358 = vpack.c.b16 %v353, %v352
      %v359 = vpack.c.b16 %v355, %v354
      %v362 = vunpack.c.l.b16 %v338
      %v363 = vunpack.c.l.b16 %v339
      %v364 = vpack.c.b16 %v363, %v362
      %vm366 = vcmask 130048
      %v368 = vsel %vm366, %v356, 0
      %v371 = vsel %vm366, %v357, 0
      %v374 = vsel %vm366, %v358, 0
      %v377 = vsel %vm366, %v359, 0
      %379 = vmatprep.subr.bf16.mxu0 0
      %380 = vmatpush1.bf16.msra.mxu0 %v364
      %381 = vmatprep.subr.bf16.mxu0 0
      %382 = vmatpush1.bf16.msra.mxu0 0
      %383 = vmatprep.subr.bf16.mxu0 0
      %384 = vmatpush1.bf16.msra.mxu0 0
      %385 = vmatprep.subr.bf16.mxu0 0
      %386 = vmatpush1.bf16.msra.mxu0 0
      %387 = vmatprep.subr.bf16.mxu0 0
      %388 = vmatpush1.bf16.msra.mxu0 0
      %389 = vmatprep.subr.bf16.mxu0 0
      %390 = vmatpush1.bf16.msra.mxu0 0
      %391 = vmatprep.subr.bf16.mxu0 0
      %392 = vmatpush1.bf16.msra.mxu0 0
      %393 = vmatprep.subr.bf16.mxu0 0
      %394 = vmatpush1.bf16.msra.mxu0 0
      %395 = vmatprep.subr.bf16.mxu0 0
      %396 = vmatpush1.bf16.msra.mxu0 0
      %397 = vmatprep.subr.bf16.mxu0 0
      %398 = vmatpush1.bf16.msra.mxu0 0
      %399 = vmatprep.subr.bf16.mxu0 0
      %400 = vmatpush1.bf16.msra.mxu0 0
      %401 = vmatprep.subr.bf16.mxu0 0
      %402 = vmatpush1.bf16.msra.mxu0 0
      %403 = vmatprep.subr.bf16.mxu0 0
      %404 = vmatpush1.bf16.msra.mxu0 0
      %405 = vmatprep.subr.bf16.mxu0 0
      %406 = vmatpush1.bf16.msra.mxu0 0
      %407 = vmatprep.subr.bf16.mxu0 0
      %408 = vmatpush1.bf16.msra.mxu0 0
      %409 = vmatprep.subr.bf16.mxu0 0
      %410 = vmatpush1.bf16.msra.mxu0 0
      %411 = vmatprep.mubr.bf16.mxu0 0
      %412 = vmatmul.mubr.bf16.gmra.mrb[0].mxu0 %v368
      %v413 = vpop.f32.mrb[0].mxu0
      %v414 = vadd.f32 0.0, %v413
      %v415 = vpop.f32.mrb[0].mxu0
      %v416 = vpop.f32.mrb[0].mxu0
      %v417 = vadd.f32 0.0, %v416
      %v418 = vpop.f32.mrb[0].mxu0
      %419 = vmatprep.mubr.bf16.mxu0 0
      %420 = vmatmul.mubr.bf16.gmra.mrb[0].mxu0 %v371
      %v421 = vpop.f32.mrb[0].mxu0
      %v422 = vadd.f32 0.0, %v421
      %v423 = vpop.f32.mrb[0].mxu0
      %v424 = vpop.f32.mrb[0].mxu0
      %v425 = vadd.f32 0.0, %v424
      %v426 = vpop.f32.mrb[0].mxu0
      %427 = vmatprep.mubr.bf16.mxu0 0
      %428 = vmatmul.mubr.bf16.gmra.mrb[0].mxu0 %v374
      %v429 = vpop.f32.mrb[0].mxu0
      %v430 = vadd.f32 0.0, %v429
      %v431 = vpop.f32.mrb[0].mxu0
      %v432 = vpop.f32.mrb[0].mxu0
      %v433 = vadd.f32 0.0, %v432
      %v434 = vpop.f32.mrb[0].mxu0
      %435 = vmatprep.mubr.bf16.mxu0 0
      %436 = vmatmul.mubr.bf16.gmra.mrb[0].mxu0 %v377
      %v437 = vpop.f32.mrb[0].mxu0
      %v438 = vadd.f32 0.0, %v437
      %v439 = vpop.f32.mrb[0].mxu0
      %v440 = vpop.f32.mrb[0].mxu0
      %v441 = vadd.f32 0.0, %v440
      %v442 = vpop.f32.mrb[0].mxu0
      %443 = vdwg.mxu0
      %v444 = vpack.c.bf16 %v417, %v414
      %v445 = vpack.c.bf16 %v425, %v422
      %v446 = vpack.c.bf16 %v433, %v430
      %v447 = vpack.c.bf16 %v441, %v438
      %v448 = vld [vmem:[%s3] sm:$0x1]
      %v449 = vpack.c.bf16 %v448, %v448
      %v451 = vpack.i.b16 %v449, %v449
      %v453 = vlaneseq
      %v454 = vshrl.u32 %v453, 7
      %v455 = vsub.s32 0, %v454
      %v456 = vrot.slane %v451, %v455
      %v457 = vadd.bf16 %v444, %v456
      %v458 = vadd.bf16 %v445, %v456
      %v459 = vadd.bf16 %v446, %v456
      %v460 = vadd.bf16 %v447, %v456
      %v461 = vtanh.bf16.pop %v457
      %v462 = vtanh.bf16.pop %v458
      %v463 = vtanh.bf16.pop %v459
      %v464 = vtanh.bf16.pop %v460
      %v465 = vld [vmem:[%s316] sm:$0xf]
      %v466 = vld [vmem:[%s316 + $0x4] sm:$0xf]
      %v467 = vld [vmem:[%s316 + $0x8] sm:$0xf]
      %v468 = vld [vmem:[%s316 + $0xc] sm:$0xf]
      %v469 = vld [vmem:[%s316 + $0x10] sm:$0xf]
      %v470 = vld [vmem:[%s316 + $0x14] sm:$0xf]
      %v471 = vld [vmem:[%s316 + $0x18] sm:$0xf]
      %v472 = vld [vmem:[%s316 + $0x1c] sm:$0xf]
      %v481 = vunpack.c.l.b16 %v465
      %v482 = vunpack.c.l.b16 %v466
      %v483 = vunpack.c.l.b16 %v467
      %v484 = vunpack.c.l.b16 %v468
      %v485 = vunpack.c.l.b16 %v469
      %v486 = vunpack.c.l.b16 %v470
      %v487 = vunpack.c.l.b16 %v471
      %v488 = vunpack.c.l.b16 %v472
      %v489 = vpack.c.b16 %v482, %v481
      %v490 = vpack.c.b16 %v484, %v483
      %v491 = vpack.c.b16 %v486, %v485
      %v492 = vpack.c.b16 %v488, %v487
      %497 = vrot.lane.b32.xlu0 %v461, 16
      %v498 = vpop.permute.xlu0 %497
      %499 = vrot.lane.b32.xlu0 %v462, 16
      %v500 = vpop.permute.xlu0 %499
      %501 = vrot.lane.b32.xlu0 %v463, 16
      %v502 = vpop.permute.xlu0 %501
      %503 = vrot.lane.b32.xlu0 %v464, 16
      %v504 = vpop.permute.xlu0 %503
      %v507 = vsel %vm366, %v489, %v498
      %v510 = vsel %vm366, %v490, %v500
      %v513 = vsel %vm366, %v491, %v502
      %v516 = vsel %vm366, %v492, %v504
      %v517 = vld [vmem:[%s4] sm:$0xf]
      %v518 = vld [vmem:[%s4 + $0x4] sm:$0xf]
      %v519 = vld [vmem:[%s4 + $0x8] sm:$0xf]
      %v520 = vld [vmem:[%s4 + $0xc] sm:$0xf]
      %v525 = vunpack.c.l.b16 %v517
      %v526 = vunpack.c.l.b16 %v518
      %v527 = vunpack.c.l.b16 %v519
      %v528 = vunpack.c.l.b16 %v520
      %v529 = vpack.c.b16 %v526, %v525
      %v530 = vpack.c.b16 %v528, %v527
      %vm533 = vcmask 261120
      %v534 = vsel %vm533, %v507, 0
      %v536 = vsel %vm533, %v510, 0
      %v538 = vsel %vm533, %v513, 0
      %v540 = vsel %vm533, %v516, 0
      %542 = vmatprep.subr.bf16.mxu0 0
      %543 = vmatpush1.bf16.msra.mxu0 %v529
      %544 = vmatprep.subr.bf16.mxu0 0
      %545 = vmatpush1.bf16.msra.mxu0 %v530
      %546 = vmatprep.subr.bf16.mxu0 0
      %547 = vmatpush1.bf16.msra.mxu0 0
      %548 = vmatprep.subr.bf16.mxu0 0
      %549 = vmatpush1.bf16.msra.mxu0 0
      %550 = vmatprep.subr.bf16.mxu0 0
      %551 = vmatpush1.bf16.msra.mxu0 0
      %552 = vmatprep.subr.bf16.mxu0 0
      %553 = vmatpush1.bf16.msra.mxu0 0
      %554 = vmatprep.subr.bf16.mxu0 0
      %555 = vmatpush1.bf16.msra.mxu0 0
      %556 = vmatprep.subr.bf16.mxu0 0
      %557 = vmatpush1.bf16.msra.mxu0 0
      %558 = vmatprep.subr.bf16.mxu0 0
      %559 = vmatpush1.bf16.msra.mxu0 0
      %560 = vmatprep.subr.bf16.mxu0 0
      %561 = vmatpush1.bf16.msra.mxu0 0
      %562 = vmatprep.subr.bf16.mxu0 0
      %563 = vmatpush1.bf16.msra.mxu0 0
      %564 = vmatprep.subr.bf16.mxu0 0
      %565 = vmatpush1.bf16.msra.mxu0 0
      %566 = vmatprep.subr.bf16.mxu0 0
      %567 = vmatpush1.bf16.msra.mxu0 0
      %568 = vmatprep.subr.bf16.mxu0 0
      %569 = vmatpush1.bf16.msra.mxu0 0
      %570 = vmatprep.subr.bf16.mxu0 0
      %571 = vmatpush1.bf16.msra.mxu0 0
      %572 = vmatprep.subr.bf16.mxu0 0
      %573 = vmatpush1.bf16.msra.mxu0 0
      %574 = vmatprep.mubr.bf16.mxu0 0
      %575 = vmatmul.mubr.bf16.gmra.mrb[0].mxu0 %v534
      %v576 = vpop.f32.mrb[0].mxu0
      %v577 = vadd.f32 0.0, %v576
      %v578 = vpop.f32.mrb[0].mxu0
      %v579 = vpop.f32.mrb[0].mxu0
      %v580 = vadd.f32 0.0, %v579
      %v581 = vpop.f32.mrb[0].mxu0
      %582 = vmatprep.mubr.bf16.mxu0 0
      %583 = vmatmul.mubr.bf16.gmra.mrb[0].mxu0 %v536
      %v584 = vpop.f32.mrb[0].mxu0
      %v585 = vadd.f32 0.0, %v584
      %v586 = vpop.f32.mrb[0].mxu0
      %v587 = vpop.f32.mrb[0].mxu0
      %v588 = vadd.f32 0.0, %v587
      %v589 = vpop.f32.mrb[0].mxu0
      %590 = vmatprep.mubr.bf16.mxu0 0
      %591 = vmatmul.mubr.bf16.gmra.mrb[0].mxu0 %v538
      %v592 = vpop.f32.mrb[0].mxu0
      %v593 = vadd.f32 0.0, %v592
      %v594 = vpop.f32.mrb[0].mxu0
      %v595 = vpop.f32.mrb[0].mxu0
      %v596 = vadd.f32 0.0, %v595
      %v597 = vpop.f32.mrb[0].mxu0
      %598 = vmatprep.mubr.bf16.mxu0 0
      %599 = vmatmul.mubr.bf16.gmra.mrb[0].mxu0 %v540
      %v600 = vpop.f32.mrb[0].mxu0
      %v601 = vadd.f32 0.0, %v600
      %v602 = vpop.f32.mrb[0].mxu0
      %v603 = vpop.f32.mrb[0].mxu0
      %v604 = vadd.f32 0.0, %v603
      %v605 = vpop.f32.mrb[0].mxu0
      %606 = vdwg.mxu0
      %v607 = vpack.c.bf16 %v577, %v577
      %v608 = vpack.c.bf16 %v580, %v580
      %v609 = vpack.c.bf16 %v585, %v585
      %v610 = vpack.c.bf16 %v588, %v588
      %v611 = vpack.c.bf16 %v593, %v593
      %v612 = vpack.c.bf16 %v596, %v596
      %v613 = vpack.c.bf16 %v601, %v601
      %v614 = vpack.c.bf16 %v604, %v604
      %v615 = vld [vmem:[%s5] sm:$0x1]
      %v616 = vpack.c.bf16 %v615, %v615
      %v618 = vpack.i.b16 %v616, %v616
      %v620 = vlaneseq
      %v621 = vshrl.u32 %v620, 7
      %v622 = vsub.s32 0, %v621
      %v623 = vrot.slane %v618, %v622
      %v624 = vadd.bf16 %v607, %v623
      %v625 = vadd.bf16 %v608, %v623
      %v626 = vadd.bf16 %v609, %v623
      %v627 = vadd.bf16 %v610, %v623
      %v628 = vadd.bf16 %v611, %v623
      %v629 = vadd.bf16 %v612, %v623
      %v630 = vadd.bf16 %v613, %v623
      %v631 = vadd.bf16 %v614, %v623
      %v632 = vmax.bf16 %v624, 0
      %v633 = vmax.bf16 %v625, 0
      %v634 = vmax.bf16 %v626, 0
      %v635 = vmax.bf16 %v627, 0
      %v636 = vmax.bf16 %v628, 0
      %v637 = vmax.bf16 %v629, 0
      %v638 = vmax.bf16 %v630, 0
      %v639 = vmax.bf16 %v631, 0
      %vm640 = vcmask 60416
      %v643 = vsel %vm640, %v632, 4286644096
      %v645 = vunpack.i.l.bf16 %v643
      %v646 = vunpack.i.h.bf16 %v643
      %v647 = vmax.f32 %v645, %v646
      %v648 = vrot.slane %v647, 4
      %v649 = vmax.f32 %v647, %v648
      %v650 = vrot.slane %v649, 2
      %v651 = vmax.f32 %v649, %v650
      %v652 = vrot.slane %v651, 1
      %v653 = vmax.f32 %v651, %v652
      %v654 = vpack.i.bf16 %v653, %v653
      %v656 = vsel %vm640, %v633, 4286644096
      %v658 = vunpack.i.l.bf16 %v656
      %v659 = vunpack.i.h.bf16 %v656
      %v660 = vmax.f32 %v658, %v659
      %v661 = vrot.slane %v660, 4
      %v662 = vmax.f32 %v660, %v661
      %v663 = vrot.slane %v662, 2
      %v664 = vmax.f32 %v662, %v663
      %v665 = vrot.slane %v664, 1
      %v666 = vmax.f32 %v664, %v665
      %v667 = vpack.i.bf16 %v666, %v666
      %v669 = vsel %vm640, %v634, 4286644096
      %v671 = vunpack.i.l.bf16 %v669
      %v672 = vunpack.i.h.bf16 %v669
      %v673 = vmax.f32 %v671, %v672
      %v674 = vrot.slane %v673, 4
      %v675 = vmax.f32 %v673, %v674
      %v676 = vrot.slane %v675, 2
      %v677 = vmax.f32 %v675, %v676
      %v678 = vrot.slane %v677, 1
      %v679 = vmax.f32 %v677, %v678
      %v680 = vpack.i.bf16 %v679, %v679
      %v682 = vsel %vm640, %v635, 4286644096
      %v684 = vunpack.i.l.bf16 %v682
      %v685 = vunpack.i.h.bf16 %v682
      %v686 = vmax.f32 %v684, %v685
      %v687 = vrot.slane %v686, 4
      %v688 = vmax.f32 %v686, %v687
      %v689 = vrot.slane %v688, 2
      %v690 = vmax.f32 %v688, %v689
      %v691 = vrot.slane %v690, 1
      %v692 = vmax.f32 %v690, %v691
      %v693 = vpack.i.bf16 %v692, %v692
      %v695 = vsel %vm640, %v636, 4286644096
      %v697 = vunpack.i.l.bf16 %v695
      %v698 = vunpack.i.h.bf16 %v695
      %v699 = vmax.f32 %v697, %v698
      %v700 = vrot.slane %v699, 4
      %v701 = vmax.f32 %v699, %v700
      %v702 = vrot.slane %v701, 2
      %v703 = vmax.f32 %v701, %v702
      %v704 = vrot.slane %v703, 1
      %v705 = vmax.f32 %v703, %v704
      %v706 = vpack.i.bf16 %v705, %v705
      %v708 = vsel %vm640, %v637, 4286644096
      %v710 = vunpack.i.l.bf16 %v708
      %v711 = vunpack.i.h.bf16 %v708
      %v712 = vmax.f32 %v710, %v711
      %v713 = vrot.slane %v712, 4
      %v714 = vmax.f32 %v712, %v713
      %v715 = vrot.slane %v714, 2
      %v716 = vmax.f32 %v714, %v715
      %v717 = vrot.slane %v716, 1
      %v718 = vmax.f32 %v716, %v717
      %v719 = vpack.i.bf16 %v718, %v718
      %v721 = vsel %vm640, %v638, 4286644096
      %v723 = vunpack.i.l.bf16 %v721
      %v724 = vunpack.i.h.bf16 %v721
      %v725 = vmax.f32 %v723, %v724
      %v726 = vrot.slane %v725, 4
      %v727 = vmax.f32 %v725, %v726
      %v728 = vrot.slane %v727, 2
      %v729 = vmax.f32 %v727, %v728
      %v730 = vrot.slane %v729, 1
      %v731 = vmax.f32 %v729, %v730
      %v732 = vpack.i.bf16 %v731, %v731
      %v734 = vsel %vm640, %v639, 4286644096
      %v736 = vunpack.i.l.bf16 %v734
      %v737 = vunpack.i.h.bf16 %v734
      %v738 = vmax.f32 %v736, %v737
      %v739 = vrot.slane %v738, 4
      %v740 = vmax.f32 %v738, %v739
      %v741 = vrot.slane %v740, 2
      %v742 = vmax.f32 %v740, %v741
      %v743 = vrot.slane %v742, 1
      %v744 = vmax.f32 %v742, %v743
      %v745 = vpack.i.bf16 %v744, %v744
      %v746 = vld [vmem:[%s6] sm:$0xf]
      %v747 = vld [vmem:[%s6 + $0x4] sm:$0xf]
      %v748 = vld [vmem:[%s6 + $0x8] sm:$0xf]
      %v749 = vld [vmem:[%s6 + $0xc] sm:$0xf]
      %v754 = vunpack.c.l.b16 %v746
      %v755 = vunpack.c.l.b16 %v747
      %v756 = vunpack.c.l.b16 %v748
      %v757 = vunpack.c.l.b16 %v749
      %v758 = vpack.c.b16 %v755, %v754
      %v759 = vpack.c.b16 %v757, %v756
      %762 = vmatprep.subr.bf16.mxu0 0
      %763 = vmatpush1.bf16.msra.mxu0 %v758
      %764 = vmatprep.subr.bf16.mxu0 0
      %765 = vmatpush1.bf16.msra.mxu0 %v759
      %766 = vmatprep.subr.bf16.mxu0 0
      %767 = vmatpush1.bf16.msra.mxu0 0
      %768 = vmatprep.subr.bf16.mxu0 0
      %769 = vmatpush1.bf16.msra.mxu0 0
      %770 = vmatprep.subr.bf16.mxu0 0
      %771 = vmatpush1.bf16.msra.mxu0 0
      %772 = vmatprep.subr.bf16.mxu0 0
      %773 = vmatpush1.bf16.msra.mxu0 0
      %774 = vmatprep.subr.bf16.mxu0 0
      %775 = vmatpush1.bf16.msra.mxu0 0
      %776 = vmatprep.subr.bf16.mxu0 0
      %777 = vmatpush1.bf16.msra.mxu0 0
      %778 = vmatprep.subr.bf16.mxu0 0
      %779 = vmatpush1.bf16.msra.mxu0 0
      %780 = vmatprep.subr.bf16.mxu0 0
      %781 = vmatpush1.bf16.msra.mxu0 0
      %782 = vmatprep.subr.bf16.mxu0 0
      %783 = vmatpush1.bf16.msra.mxu0 0
      %784 = vmatprep.subr.bf16.mxu0 0
      %785 = vmatpush1.bf16.msra.mxu0 0
      %786 = vmatprep.subr.bf16.mxu0 0
      %787 = vmatpush1.bf16.msra.mxu0 0
      %788 = vmatprep.subr.bf16.mxu0 0
      %789 = vmatpush1.bf16.msra.mxu0 0
      %790 = vmatprep.subr.bf16.mxu0 0
      %791 = vmatpush1.bf16.msra.mxu0 0
      %792 = vmatprep.subr.bf16.mxu0 0
      %793 = vmatpush1.bf16.msra.mxu0 0
      %794 = vmatprep.mubr.bf16.mxu0 0
      %795 = vmatmul.mubr.bf16.gmra.mrb[0].mxu0 %v534
      %v796 = vpop.f32.mrb[0].mxu0
      %v797 = vadd.f32 0.0, %v796
      %v798 = vpop.f32.mrb[0].mxu0
      %v799 = vpop.f32.mrb[0].mxu0
      %v800 = vadd.f32 0.0, %v799
      %v801 = vpop.f32.mrb[0].mxu0
      %802 = vmatprep.mubr.bf16.mxu0 0
      %803 = vmatmul.mubr.bf16.gmra.mrb[0].mxu0 %v536
      %v804 = vpop.f32.mrb[0].mxu0
      %v805 = vadd.f32 0.0, %v804
      %v806 = vpop.f32.mrb[0].mxu0
      %v807 = vpop.f32.mrb[0].mxu0
      %v808 = vadd.f32 0.0, %v807
      %v809 = vpop.f32.mrb[0].mxu0
      %810 = vmatprep.mubr.bf16.mxu0 0
      %811 = vmatmul.mubr.bf16.gmra.mrb[0].mxu0 %v538
      %v812 = vpop.f32.mrb[0].mxu0
      %v813 = vadd.f32 0.0, %v812
      %v814 = vpop.f32.mrb[0].mxu0
      %v815 = vpop.f32.mrb[0].mxu0
      %v816 = vadd.f32 0.0, %v815
      %v817 = vpop.f32.mrb[0].mxu0
      %818 = vmatprep.mubr.bf16.mxu0 0
      %819 = vmatmul.mubr.bf16.gmra.mrb[0].mxu0 %v540
      %v820 = vpop.f32.mrb[0].mxu0
      %v821 = vadd.f32 0.0, %v820
      %v822 = vpop.f32.mrb[0].mxu0
      %v823 = vpop.f32.mrb[0].mxu0
      %v824 = vadd.f32 0.0, %v823
      %v825 = vpop.f32.mrb[0].mxu0
      %826 = vdwg.mxu0
      %835 = vrot.lane.b32.xlu0 %v797, 120
      %v836 = vpop.permute.xlu0 %835
      %837 = vrot.lane.b32.xlu0 %v800, 120
      %v838 = vpop.permute.xlu0 %837
      %839 = vrot.lane.b32.xlu0 %v805, 120
      %v840 = vpop.permute.xlu0 %839
      %841 = vrot.lane.b32.xlu0 %v808, 120
      %v842 = vpop.permute.xlu0 %841
      %843 = vrot.lane.b32.xlu0 %v813, 120
      %v844 = vpop.permute.xlu0 %843
      %845 = vrot.lane.b32.xlu0 %v816, 120
      %v846 = vpop.permute.xlu0 %845
      %847 = vrot.lane.b32.xlu0 %v821, 120
      %v848 = vpop.permute.xlu0 %847
      %849 = vrot.lane.b32.xlu0 %v824, 120
      %v850 = vpop.permute.xlu0 %849
      %v859 = vcombine.high %v797, 0.0
      %v861 = vunpack.c.l.s4 1983009808
      %v862 = vunpack.c.0.s8 %v861
      %v863 = vlaneseq
      %v864 = vshrl.u32 %v863, 7
      %v865 = vsub.s32 %v862, %v864
      %v866 = vrot.slane %v797, %v865
      %v868 = vunpack.c.l.s4 1983009808
      %v869 = vunpack.c.0.s8 %v868
      %v870 = vlaneseq
      %v871 = vshrl.u32 %v870, 7
      %v872 = vsub.s32 %v869, %v871
      %v873 = vrot.slane %v859, %v872
      %v874 = vcombine.high %v836, 0.0
      %v876 = vunpack.c.l.s4 1983009808
      %v877 = vunpack.c.0.s8 %v876
      %v878 = vlaneseq
      %v879 = vshrl.u32 %v878, 7
      %v880 = vsub.s32 %v877, %v879
      %v881 = vrot.slane %v836, %v880
      %v883 = vunpack.c.l.s4 1983009808
      %v884 = vunpack.c.0.s8 %v883
      %v885 = vlaneseq
      %v886 = vshrl.u32 %v885, 7
      %v887 = vsub.s32 %v884, %v886
      %v888 = vrot.slane %v874, %v887
      %v889 = vcombine.low %v866, %v881
      %v890 = vcombine.high %v866, %v881
      %v892 = vunpack.c.l.s4 1934713408
      %v893 = vunpack.c.0.s8 %v892
      %v894 = vlaneseq
      %v895 = vshrl.u32 %v894, 7
      %v896 = vsub.s32 %v893, %v895
      %v897 = vrot.slane %v889, %v896
      %v899 = vunpack.c.l.s4 1934713408
      %v900 = vunpack.c.0.s8 %v899
      %v901 = vlaneseq
      %v902 = vshrl.u32 %v901, 7
      %v903 = vsub.s32 %v900, %v902
      %v904 = vrot.slane %v890, %v903
      %v905 = vcombine.low %v873, %v888
      %v906 = vcombine.high %v873, %v888
      %v908 = vunpack.c.l.s4 1934713408
      %v909 = vunpack.c.0.s8 %v908
      %v910 = vlaneseq
      %v911 = vshrl.u32 %v910, 7
      %v912 = vsub.s32 %v909, %v911
      %v913 = vrot.slane %v905, %v912
      %v915 = vunpack.c.l.s4 1934713408
      %v916 = vunpack.c.0.s8 %v915
      %v917 = vlaneseq
      %v918 = vshrl.u32 %v917, 7
      %v919 = vsub.s32 %v916, %v918
      %v920 = vrot.slane %v906, %v919
      %v921 = vcombine.high %v897, 0.0
      %v922 = vcombine.high %v904, 0.0
      %v923 = vcombine.high %v913, 0.0
      %v924 = vcombine.high %v920, 0.0
      %v925 = vcombine.high %v800, 0.0
      %v927 = vunpack.c.l.s4 1983009808
      %v928 = vunpack.c.0.s8 %v927
      %v929 = vlaneseq
      %v930 = vshrl.u32 %v929, 7
      %v931 = vsub.s32 %v928, %v930
      %v932 = vrot.slane %v800, %v931
      %v934 = vunpack.c.l.s4 1983009808
      %v935 = vunpack.c.0.s8 %v934
      %v936 = vlaneseq
      %v937 = vshrl.u32 %v936, 7
      %v938 = vsub.s32 %v935, %v937
      %v939 = vrot.slane %v925, %v938
      %v940 = vcombine.high %v838, 0.0
      %v942 = vunpack.c.l.s4 1983009808
      %v943 = vunpack.c.0.s8 %v942
      %v944 = vlaneseq
      %v945 = vshrl.u32 %v944, 7
      %v946 = vsub.s32 %v943, %v945
      %v947 = vrot.slane %v838, %v946
      %v949 = vunpack.c.l.s4 1983009808
      %v950 = vunpack.c.0.s8 %v949
      %v951 = vlaneseq
      %v952 = vshrl.u32 %v951, 7
      %v953 = vsub.s32 %v950, %v952
      %v954 = vrot.slane %v940, %v953
      %v955 = vcombine.low %v932, %v947
      %v956 = vcombine.high %v932, %v947
      %v958 = vunpack.c.l.s4 1934713408
      %v959 = vunpack.c.0.s8 %v958
      %v960 = vlaneseq
      %v961 = vshrl.u32 %v960, 7
      %v962 = vsub.s32 %v959, %v961
      %v963 = vrot.slane %v955, %v962
      %v965 = vunpack.c.l.s4 1934713408
      %v966 = vunpack.c.0.s8 %v965
      %v967 = vlaneseq
      %v968 = vshrl.u32 %v967, 7
      %v969 = vsub.s32 %v966, %v968
      %v970 = vrot.slane %v956, %v969
      %v971 = vcombine.low %v939, %v954
      %v972 = vcombine.high %v939, %v954
      %v974 = vunpack.c.l.s4 1934713408
      %v975 = vunpack.c.0.s8 %v974
      %v976 = vlaneseq
      %v977 = vshrl.u32 %v976, 7
      %v978 = vsub.s32 %v975, %v977
      %v979 = vrot.slane %v971, %v978
      %v981 = vunpack.c.l.s4 1934713408
      %v982 = vunpack.c.0.s8 %v981
      %v983 = vlaneseq
      %v984 = vshrl.u32 %v983, 7
      %v985 = vsub.s32 %v982, %v984
      %v986 = vrot.slane %v972, %v985
      %v987 = vcombine.high %v963, 0.0
      %v988 = vcombine.high %v970, 0.0
      %v989 = vcombine.high %v979, 0.0
      %v990 = vcombine.high %v986, 0.0
      %v991 = vcombine.high %v805, 0.0
      %v993 = vunpack.c.l.s4 1983009808
      %v994 = vunpack.c.0.s8 %v993
      %v995 = vlaneseq
      %v996 = vshrl.u32 %v995, 7
      %v997 = vsub.s32 %v994, %v996
      %v998 = vrot.slane %v805, %v997
      %v1000 = vunpack.c.l.s4 1983009808
      %v1001 = vunpack.c.0.s8 %v1000
      %v1002 = vlaneseq
      %v1003 = vshrl.u32 %v1002, 7
      %v1004 = vsub.s32 %v1001, %v1003
      %v1005 = vrot.slane %v991, %v1004
      %v1006 = vcombine.high %v840, 0.0
      %v1008 = vunpack.c.l.s4 1983009808
      %v1009 = vunpack.c.0.s8 %v1008
      %v1010 = vlaneseq
      %v1011 = vshrl.u32 %v1010, 7
      %v1012 = vsub.s32 %v1009, %v1011
      %v1013 = vrot.slane %v840, %v1012
      %v1015 = vunpack.c.l.s4 1983009808
      %v1016 = vunpack.c.0.s8 %v1015
      %v1017 = vlaneseq
      %v1018 = vshrl.u32 %v1017, 7
      %v1019 = vsub.s32 %v1016, %v1018
      %v1020 = vrot.slane %v1006, %v1019
      %v1021 = vcombine.low %v998, %v1013
      %v1022 = vcombine.high %v998, %v1013
      %v1024 = vunpack.c.l.s4 1934713408
      %v1025 = vunpack.c.0.s8 %v1024
      %v1026 = vlaneseq
      %v1027 = vshrl.u32 %v1026, 7
      %v1028 = vsub.s32 %v1025, %v1027
      %v1029 = vrot.slane %v1021, %v1028
      %v1031 = vunpack.c.l.s4 1934713408
      %v1032 = vunpack.c.0.s8 %v1031
      %v1033 = vlaneseq
      %v1034 = vshrl.u32 %v1033, 7
      %v1035 = vsub.s32 %v1032, %v1034
      %v1036 = vrot.slane %v1022, %v1035
      %v1037 = vcombine.low %v1005, %v1020
      %v1038 = vcombine.high %v1005, %v1020
      %v1040 = vunpack.c.l.s4 1934713408
      %v1041 = vunpack.c.0.s8 %v1040
      %v1042 = vlaneseq
      %v1043 = vshrl.u32 %v1042, 7
      %v1044 = vsub.s32 %v1041, %v1043
      %v1045 = vrot.slane %v1037, %v1044
      %v1047 = vunpack.c.l.s4 1934713408
      %v1048 = vunpack.c.0.s8 %v1047
      %v1049 = vlaneseq
      %v1050 = vshrl.u32 %v1049, 7
      %v1051 = vsub.s32 %v1048, %v1050
      %v1052 = vrot.slane %v1038, %v1051
      %v1053 = vcombine.high %v1029, 0.0
      %v1054 = vcombine.high %v1036, 0.0
      %v1055 = vcombine.high %v1045, 0.0
      %v1056 = vcombine.high %v1052, 0.0
      %v1057 = vcombine.high %v808, 0.0
      %v1059 = vunpack.c.l.s4 1983009808
      %v1060 = vunpack.c.0.s8 %v1059
      %v1061 = vlaneseq
      %v1062 = vshrl.u32 %v1061, 7
      %v1063 = vsub.s32 %v1060, %v1062
      %v1064 = vrot.slane %v808, %v1063
      %v1066 = vunpack.c.l.s4 1983009808
      %v1067 = vunpack.c.0.s8 %v1066
      %v1068 = vlaneseq
      %v1069 = vshrl.u32 %v1068, 7
      %v1070 = vsub.s32 %v1067, %v1069
      %v1071 = vrot.slane %v1057, %v1070
      %v1072 = vcombine.high %v842, 0.0
      %v1074 = vunpack.c.l.s4 1983009808
      %v1075 = vunpack.c.0.s8 %v1074
      %v1076 = vlaneseq
      %v1077 = vshrl.u32 %v1076, 7
      %v1078 = vsub.s32 %v1075, %v1077
      %v1079 = vrot.slane %v842, %v1078
      %v1081 = vunpack.c.l.s4 1983009808
      %v1082 = vunpack.c.0.s8 %v1081
      %v1083 = vlaneseq
      %v1084 = vshrl.u32 %v1083, 7
      %v1085 = vsub.s32 %v1082, %v1084
      %v1086 = vrot.slane %v1072, %v1085
      %v1087 = vcombine.low %v1064, %v1079
      %v1088 = vcombine.high %v1064, %v1079
      %v1090 = vunpack.c.l.s4 1934713408
      %v1091 = vunpack.c.0.s8 %v1090
      %v1092 = vlaneseq
      %v1093 = vshrl.u32 %v1092, 7
      %v1094 = vsub.s32 %v1091, %v1093
      %v1095 = vrot.slane %v1087, %v1094
      %v1097 = vunpack.c.l.s4 1934713408
      %v1098 = vunpack.c.0.s8 %v1097
      %v1099 = vlaneseq
      %v1100 = vshrl.u32 %v1099, 7
      %v1101 = vsub.s32 %v1098, %v1100
      %v1102 = vrot.slane %v1088, %v1101
      %v1103 = vcombine.low %v1071, %v1086
      %v1104 = vcombine.high %v1071, %v1086
      %v1106 = vunpack.c.l.s4 1934713408
      %v1107 = vunpack.c.0.s8 %v1106
      %v1108 = vlaneseq
      %v1109 = vshrl.u32 %v1108, 7
      %v1110 = vsub.s32 %v1107, %v1109
      %v1111 = vrot.slane %v1103, %v1110
      %v1113 = vunpack.c.l.s4 1934713408
      %v1114 = vunpack.c.0.s8 %v1113
      %v1115 = vlaneseq
      %v1116 = vshrl.u32 %v1115, 7
      %v1117 = vsub.s32 %v1114, %v1116
      %v1118 = vrot.slane %v1104, %v1117
      %v1119 = vcombine.high %v1095, 0.0
      %v1120 = vcombine.high %v1102, 0.0
      %v1121 = vcombine.high %v1111, 0.0
      %v1122 = vcombine.high %v1118, 0.0
      %v1123 = vcombine.high %v813, 0.0
      %v1125 = vunpack.c.l.s4 1983009808
      %v1126 = vunpack.c.0.s8 %v1125
      %v1127 = vlaneseq
      %v1128 = vshrl.u32 %v1127, 7
      %v1129 = vsub.s32 %v1126, %v1128
      %v1130 = vrot.slane %v813, %v1129
      %v1132 = vunpack.c.l.s4 1983009808
      %v1133 = vunpack.c.0.s8 %v1132
      %v1134 = vlaneseq
      %v1135 = vshrl.u32 %v1134, 7
      %v1136 = vsub.s32 %v1133, %v1135
      %v1137 = vrot.slane %v1123, %v1136
      %v1138 = vcombine.high %v844, 0.0
      %v1140 = vunpack.c.l.s4 1983009808
      %v1141 = vunpack.c.0.s8 %v1140
      %v1142 = vlaneseq
      %v1143 = vshrl.u32 %v1142, 7
      %v1144 = vsub.s32 %v1141, %v1143
      %v1145 = vrot.slane %v844, %v1144
      %v1147 = vunpack.c.l.s4 1983009808
      %v1148 = vunpack.c.0.s8 %v1147
      %v1149 = vlaneseq
      %v1150 = vshrl.u32 %v1149, 7
      %v1151 = vsub.s32 %v1148, %v1150
      %v1152 = vrot.slane %v1138, %v1151
      %v1153 = vcombine.low %v1130, %v1145
      %v1154 = vcombine.high %v1130, %v1145
      %v1156 = vunpack.c.l.s4 1934713408
      %v1157 = vunpack.c.0.s8 %v1156
      %v1158 = vlaneseq
      %v1159 = vshrl.u32 %v1158, 7
      %v1160 = vsub.s32 %v1157, %v1159
      %v1161 = vrot.slane %v1153, %v1160
      %v1163 = vunpack.c.l.s4 1934713408
      %v1164 = vunpack.c.0.s8 %v1163
      %v1165 = vlaneseq
      %v1166 = vshrl.u32 %v1165, 7
      %v1167 = vsub.s32 %v1164, %v1166
      %v1168 = vrot.slane %v1154, %v1167
      %v1169 = vcombine.low %v1137, %v1152
      %v1170 = vcombine.high %v1137, %v1152
      %v1172 = vunpack.c.l.s4 1934713408
      %v1173 = vunpack.c.0.s8 %v1172
      %v1174 = vlaneseq
      %v1175 = vshrl.u32 %v1174, 7
      %v1176 = vsub.s32 %v1173, %v1175
      %v1177 = vrot.slane %v1169, %v1176
      %v1179 = vunpack.c.l.s4 1934713408
      %v1180 = vunpack.c.0.s8 %v1179
      %v1181 = vlaneseq
      %v1182 = vshrl.u32 %v1181, 7
      %v1183 = vsub.s32 %v1180, %v1182
      %v1184 = vrot.slane %v1170, %v1183
      %v1185 = vcombine.high %v1161, 0.0
      %v1186 = vcombine.high %v1168, 0.0
      %v1187 = vcombine.high %v1177, 0.0
      %v1188 = vcombine.high %v1184, 0.0
      %v1189 = vcombine.high %v816, 0.0
      %v1191 = vunpack.c.l.s4 1983009808
      %v1192 = vunpack.c.0.s8 %v1191
      %v1193 = vlaneseq
      %v1194 = vshrl.u32 %v1193, 7
      %v1195 = vsub.s32 %v1192, %v1194
      %v1196 = vrot.slane %v816, %v1195
      %v1198 = vunpack.c.l.s4 1983009808
      %v1199 = vunpack.c.0.s8 %v1198
      %v1200 = vlaneseq
      %v1201 = vshrl.u32 %v1200, 7
      %v1202 = vsub.s32 %v1199, %v1201
      %v1203 = vrot.slane %v1189, %v1202
      %v1204 = vcombine.high %v846, 0.0
      %v1206 = vunpack.c.l.s4 1983009808
      %v1207 = vunpack.c.0.s8 %v1206
      %v1208 = vlaneseq
      %v1209 = vshrl.u32 %v1208, 7
      %v1210 = vsub.s32 %v1207, %v1209
      %v1211 = vrot.slane %v846, %v1210
      %v1213 = vunpack.c.l.s4 1983009808
      %v1214 = vunpack.c.0.s8 %v1213
      %v1215 = vlaneseq
      %v1216 = vshrl.u32 %v1215, 7
      %v1217 = vsub.s32 %v1214, %v1216
      %v1218 = vrot.slane %v1204, %v1217
      %v1219 = vcombine.low %v1196, %v1211
      %v1220 = vcombine.high %v1196, %v1211
      %v1222 = vunpack.c.l.s4 1934713408
      %v1223 = vunpack.c.0.s8 %v1222
      %v1224 = vlaneseq
      %v1225 = vshrl.u32 %v1224, 7
      %v1226 = vsub.s32 %v1223, %v1225
      %v1227 = vrot.slane %v1219, %v1226
      %v1229 = vunpack.c.l.s4 1934713408
      %v1230 = vunpack.c.0.s8 %v1229
      %v1231 = vlaneseq
      %v1232 = vshrl.u32 %v1231, 7
      %v1233 = vsub.s32 %v1230, %v1232
      %v1234 = vrot.slane %v1220, %v1233
      %v1235 = vcombine.low %v1203, %v1218
      %v1236 = vcombine.high %v1203, %v1218
      %v1238 = vunpack.c.l.s4 1934713408
      %v1239 = vunpack.c.0.s8 %v1238
      %v1240 = vlaneseq
      %v1241 = vshrl.u32 %v1240, 7
      %v1242 = vsub.s32 %v1239, %v1241
      %v1243 = vrot.slane %v1235, %v1242
      %v1245 = vunpack.c.l.s4 1934713408
      %v1246 = vunpack.c.0.s8 %v1245
      %v1247 = vlaneseq
      %v1248 = vshrl.u32 %v1247, 7
      %v1249 = vsub.s32 %v1246, %v1248
      %v1250 = vrot.slane %v1236, %v1249
      %v1251 = vcombine.high %v1227, 0.0
      %v1252 = vcombine.high %v1234, 0.0
      %v1253 = vcombine.high %v1243, 0.0
      %v1254 = vcombine.high %v1250, 0.0
      %v1255 = vcombine.high %v821, 0.0
      %v1257 = vunpack.c.l.s4 1983009808
      %v1258 = vunpack.c.0.s8 %v1257
      %v1259 = vlaneseq
      %v1260 = vshrl.u32 %v1259, 7
      %v1261 = vsub.s32 %v1258, %v1260
      %v1262 = vrot.slane %v821, %v1261
      %v1264 = vunpack.c.l.s4 1983009808
      %v1265 = vunpack.c.0.s8 %v1264
      %v1266 = vlaneseq
      %v1267 = vshrl.u32 %v1266, 7
      %v1268 = vsub.s32 %v1265, %v1267
      %v1269 = vrot.slane %v1255, %v1268
      %v1270 = vcombine.high %v848, 0.0
      %v1272 = vunpack.c.l.s4 1983009808
      %v1273 = vunpack.c.0.s8 %v1272
      %v1274 = vlaneseq
      %v1275 = vshrl.u32 %v1274, 7
      %v1276 = vsub.s32 %v1273, %v1275
      %v1277 = vrot.slane %v848, %v1276
      %v1279 = vunpack.c.l.s4 1983009808
      %v1280 = vunpack.c.0.s8 %v1279
      %v1281 = vlaneseq
      %v1282 = vshrl.u32 %v1281, 7
      %v1283 = vsub.s32 %v1280, %v1282
      %v1284 = vrot.slane %v1270, %v1283
      %v1285 = vcombine.low %v1262, %v1277
      %v1286 = vcombine.high %v1262, %v1277
      %v1288 = vunpack.c.l.s4 1934713408
      %v1289 = vunpack.c.0.s8 %v1288
      %v1290 = vlaneseq
      %v1291 = vshrl.u32 %v1290, 7
      %v1292 = vsub.s32 %v1289, %v1291
      %v1293 = vrot.slane %v1285, %v1292
      %v1295 = vunpack.c.l.s4 1934713408
      %v1296 = vunpack.c.0.s8 %v1295
      %v1297 = vlaneseq
      %v1298 = vshrl.u32 %v1297, 7
      %v1299 = vsub.s32 %v1296, %v1298
      %v1300 = vrot.slane %v1286, %v1299
      %v1301 = vcombine.low %v1269, %v1284
      %v1302 = vcombine.high %v1269, %v1284
      %v1304 = vunpack.c.l.s4 1934713408
      %v1305 = vunpack.c.0.s8 %v1304
      %v1306 = vlaneseq
      %v1307 = vshrl.u32 %v1306, 7
      %v1308 = vsub.s32 %v1305, %v1307
      %v1309 = vrot.slane %v1301, %v1308
      %v1311 = vunpack.c.l.s4 1934713408
      %v1312 = vunpack.c.0.s8 %v1311
      %v1313 = vlaneseq
      %v1314 = vshrl.u32 %v1313, 7
      %v1315 = vsub.s32 %v1312, %v1314
      %v1316 = vrot.slane %v1302, %v1315
      %v1317 = vcombine.high %v1293, 0.0
      %v1318 = vcombine.high %v1300, 0.0
      %v1319 = vcombine.high %v1309, 0.0
      %v1320 = vcombine.high %v1316, 0.0
      %v1321 = vcombine.high %v824, 0.0
      %v1323 = vunpack.c.l.s4 1983009808
      %v1324 = vunpack.c.0.s8 %v1323
      %v1325 = vlaneseq
      %v1326 = vshrl.u32 %v1325, 7
      %v1327 = vsub.s32 %v1324, %v1326
      %v1328 = vrot.slane %v824, %v1327
      %v1330 = vunpack.c.l.s4 1983009808
      %v1331 = vunpack.c.0.s8 %v1330
      %v1332 = vlaneseq
      %v1333 = vshrl.u32 %v1332, 7
      %v1334 = vsub.s32 %v1331, %v1333
      %v1335 = vrot.slane %v1321, %v1334
      %v1336 = vcombine.high %v850, 0.0
      %v1338 = vunpack.c.l.s4 1983009808
      %v1339 = vunpack.c.0.s8 %v1338
      %v1340 = vlaneseq
      %v1341 = vshrl.u32 %v1340, 7
      %v1342 = vsub.s32 %v1339, %v1341
      %v1343 = vrot.slane %v850, %v1342
      %v1345 = vunpack.c.l.s4 1983009808
      %v1346 = vunpack.c.0.s8 %v1345
      %v1347 = vlaneseq
      %v1348 = vshrl.u32 %v1347, 7
      %v1349 = vsub.s32 %v1346, %v1348
      %v1350 = vrot.slane %v1336, %v1349
      %v1351 = vcombine.low %v1328, %v1343
      %v1352 = vcombine.high %v1328, %v1343
      %v1354 = vunpack.c.l.s4 1934713408
      %v1355 = vunpack.c.0.s8 %v1354
      %v1356 = vlaneseq
      %v1357 = vshrl.u32 %v1356, 7
      %v1358 = vsub.s32 %v1355, %v1357
      %v1359 = vrot.slane %v1351, %v1358
      %v1361 = vunpack.c.l.s4 1934713408
      %v1362 = vunpack.c.0.s8 %v1361
      %v1363 = vlaneseq
      %v1364 = vshrl.u32 %v1363, 7
      %v1365 = vsub.s32 %v1362, %v1364
      %v1366 = vrot.slane %v1352, %v1365
      %v1367 = vcombine.low %v1335, %v1350
      %v1368 = vcombine.high %v1335, %v1350
      %v1370 = vunpack.c.l.s4 1934713408
      %v1371 = vunpack.c.0.s8 %v1370
      %v1372 = vlaneseq
      %v1373 = vshrl.u32 %v1372, 7
      %v1374 = vsub.s32 %v1371, %v1373
      %v1375 = vrot.slane %v1367, %v1374
      %v1377 = vunpack.c.l.s4 1934713408
      %v1378 = vunpack.c.0.s8 %v1377
      %v1379 = vlaneseq
      %v1380 = vshrl.u32 %v1379, 7
      %v1381 = vsub.s32 %v1378, %v1380
      %v1382 = vrot.slane %v1368, %v1381
      %v1383 = vcombine.high %v1359, 0.0
      %v1384 = vcombine.high %v1366, 0.0
      %v1385 = vcombine.high %v1375, 0.0
      %v1386 = vcombine.high %v1382, 0.0
      %v1443 = vrot.slane %v921, 1
      %v1444 = vrot.slane %v904, 1
      %v1445 = vrot.slane %v922, 1
      %v1446 = vrot.slane %v913, 1
      %v1447 = vrot.slane %v923, 1
      %v1448 = vrot.slane %v920, 1
      %v1449 = vrot.slane %v924, 1
      %v1450 = vrot.slane %v987, 1
      %v1451 = vrot.slane %v970, 1
      %v1452 = vrot.slane %v988, 1
      %v1453 = vrot.slane %v979, 1
      %v1454 = vrot.slane %v989, 1
      %v1455 = vrot.slane %v986, 1
      %v1456 = vrot.slane %v990, 1
      %v1457 = vrot.slane %v1053, 1
      %v1458 = vrot.slane %v1036, 1
      %v1459 = vrot.slane %v1054, 1
      %v1460 = vrot.slane %v1045, 1
      %v1461 = vrot.slane %v1055, 1
      %v1462 = vrot.slane %v1052, 1
      %v1463 = vrot.slane %v1056, 1
      %v1464 = vrot.slane %v1119, 1
      %v1465 = vrot.slane %v1102, 1
      %v1466 = vrot.slane %v1120, 1
      %v1467 = vrot.slane %v1111, 1
      %v1468 = vrot.slane %v1121, 1
      %v1469 = vrot.slane %v1118, 1
      %v1470 = vrot.slane %v1122, 1
      %v1471 = vrot.slane %v1185, 1
      %v1472 = vrot.slane %v1168, 1
      %v1473 = vrot.slane %v1186, 1
      %v1474 = vrot.slane %v1177, 1
      %v1475 = vrot.slane %v1187, 1
      %v1476 = vrot.slane %v1184, 1
      %v1477 = vrot.slane %v1188, 1
      %v1478 = vrot.slane %v1251, 1
      %v1479 = vrot.slane %v1234, 1
      %v1480 = vrot.slane %v1252, 1
      %v1481 = vrot.slane %v1243, 1
      %v1482 = vrot.slane %v1253, 1
      %v1483 = vrot.slane %v1250, 1
      %v1484 = vrot.slane %v1254, 1
      %v1485 = vrot.slane %v1317, 1
      %v1486 = vrot.slane %v1300, 1
      %v1487 = vrot.slane %v1318, 1
      %v1488 = vrot.slane %v1309, 1
      %v1489 = vrot.slane %v1319, 1
      %v1490 = vrot.slane %v1316, 1
      %v1491 = vrot.slane %v1320, 1
      %v1492 = vrot.slane %v1383, 1
      %v1493 = vrot.slane %v1366, 1
      %v1494 = vrot.slane %v1384, 1
      %v1495 = vrot.slane %v1375, 1
      %v1496 = vrot.slane %v1385, 1
      %v1497 = vrot.slane %v1382, 1
      %v1498 = vrot.slane %v1386, 1
      %v1555 = vadd.f32 %v897, %v1443
      %v1556 = vadd.f32 %v921, %v1444
      %v1557 = vadd.f32 %v904, %v1445
      %v1558 = vadd.f32 %v922, %v1446
      %v1559 = vadd.f32 %v913, %v1447
      %v1560 = vadd.f32 %v923, %v1448
      %v1561 = vadd.f32 %v920, %v1449
      %v1562 = vadd.f32 %v963, %v1450
      %v1563 = vadd.f32 %v987, %v1451
      %v1564 = vadd.f32 %v970, %v1452
      %v1565 = vadd.f32 %v988, %v1453
      %v1566 = vadd.f32 %v979, %v1454
      %v1567 = vadd.f32 %v989, %v1455
      %v1568 = vadd.f32 %v986, %v1456
      %v1569 = vadd.f32 %v1029, %v1457
      %v1570 = vadd.f32 %v1053, %v1458
      %v1571 = vadd.f32 %v1036, %v1459
      %v1572 = vadd.f32 %v1054, %v1460
      %v1573 = vadd.f32 %v1045, %v1461
      %v1574 = vadd.f32 %v1055, %v1462
      %v1575 = vadd.f32 %v1052, %v1463
      %v1576 = vadd.f32 %v1095, %v1464
      %v1577 = vadd.f32 %v1119, %v1465
      %v1578 = vadd.f32 %v1102, %v1466
      %v1579 = vadd.f32 %v1120, %v1467
      %v1580 = vadd.f32 %v1111, %v1468
      %v1581 = vadd.f32 %v1121, %v1469
      %v1582 = vadd.f32 %v1118, %v1470
      %v1583 = vadd.f32 %v1161, %v1471
      %v1584 = vadd.f32 %v1185, %v1472
      %v1585 = vadd.f32 %v1168, %v1473
      %v1586 = vadd.f32 %v1186, %v1474
      %v1587 = vadd.f32 %v1177, %v1475
      %v1588 = vadd.f32 %v1187, %v1476
      %v1589 = vadd.f32 %v1184, %v1477
      %v1590 = vadd.f32 %v1227, %v1478
      %v1591 = vadd.f32 %v1251, %v1479
      %v1592 = vadd.f32 %v1234, %v1480
      %v1593 = vadd.f32 %v1252, %v1481
      %v1594 = vadd.f32 %v1243, %v1482
      %v1595 = vadd.f32 %v1253, %v1483
      %v1596 = vadd.f32 %v1250, %v1484
      %v1597 = vadd.f32 %v1293, %v1485
      %v1598 = vadd.f32 %v1317, %v1486
      %v1599 = vadd.f32 %v1300, %v1487
      %v1600 = vadd.f32 %v1318, %v1488
      %v1601 = vadd.f32 %v1309, %v1489
      %v1602 = vadd.f32 %v1319, %v1490
      %v1603 = vadd.f32 %v1316, %v1491
      %v1604 = vadd.f32 %v1359, %v1492
      %v1605 = vadd.f32 %v1383, %v1493
      %v1606 = vadd.f32 %v1366, %v1494
      %v1607 = vadd.f32 %v1384, %v1495
      %v1608 = vadd.f32 %v1375, %v1496
      %v1609 = vadd.f32 %v1385, %v1497
      %v1610 = vadd.f32 %v1382, %v1498
      %v1611 = vpack.c.bf16 %v1555, %v1555
      %v1612 = vpack.c.bf16 %v1556, %v1556
      %v1613 = vpack.c.bf16 %v1557, %v1557
      %v1614 = vpack.c.bf16 %v1558, %v1558
      %v1615 = vpack.c.bf16 %v1559, %v1559
      %v1616 = vpack.c.bf16 %v1560, %v1560
      %v1617 = vpack.c.bf16 %v1561, %v1561
      %v1618 = vpack.c.bf16 %v1562, %v1562
      %v1619 = vpack.c.bf16 %v1563, %v1563
      %v1620 = vpack.c.bf16 %v1564, %v1564
      %v1621 = vpack.c.bf16 %v1565, %v1565
      %v1622 = vpack.c.bf16 %v1566, %v1566
      %v1623 = vpack.c.bf16 %v1567, %v1567
      %v1624 = vpack.c.bf16 %v1568, %v1568
      %v1625 = vpack.c.bf16 %v1569, %v1569
      %v1626 = vpack.c.bf16 %v1570, %v1570
      %v1627 = vpack.c.bf16 %v1571, %v1571
      %v1628 = vpack.c.bf16 %v1572, %v1572
      %v1629 = vpack.c.bf16 %v1573, %v1573
      %v1630 = vpack.c.bf16 %v1574, %v1574
      %v1631 = vpack.c.bf16 %v1575, %v1575
      %v1632 = vpack.c.bf16 %v1576, %v1576
      %v1633 = vpack.c.bf16 %v1577, %v1577
      %v1634 = vpack.c.bf16 %v1578, %v1578
      %v1635 = vpack.c.bf16 %v1579, %v1579
      %v1636 = vpack.c.bf16 %v1580, %v1580
      %v1637 = vpack.c.bf16 %v1581, %v1581
      %v1638 = vpack.c.bf16 %v1582, %v1582
      %v1639 = vpack.c.bf16 %v1583, %v1583
      %v1640 = vpack.c.bf16 %v1584, %v1584
      %v1641 = vpack.c.bf16 %v1585, %v1585
      %v1642 = vpack.c.bf16 %v1586, %v1586
      %v1643 = vpack.c.bf16 %v1587, %v1587
      %v1644 = vpack.c.bf16 %v1588, %v1588
      %v1645 = vpack.c.bf16 %v1589, %v1589
      %v1646 = vpack.c.bf16 %v1590, %v1590
      %v1647 = vpack.c.bf16 %v1591, %v1591
      %v1648 = vpack.c.bf16 %v1592, %v1592
      %v1649 = vpack.c.bf16 %v1593, %v1593
      %v1650 = vpack.c.bf16 %v1594, %v1594
      %v1651 = vpack.c.bf16 %v1595, %v1595
      %v1652 = vpack.c.bf16 %v1596, %v1596
      %v1653 = vpack.c.bf16 %v1597, %v1597
      %v1654 = vpack.c.bf16 %v1598, %v1598
      %v1655 = vpack.c.bf16 %v1599, %v1599
      %v1656 = vpack.c.bf16 %v1600, %v1600
      %v1657 = vpack.c.bf16 %v1601, %v1601
      %v1658 = vpack.c.bf16 %v1602, %v1602
      %v1659 = vpack.c.bf16 %v1603, %v1603
      %v1660 = vpack.c.bf16 %v1604, %v1604
      %v1661 = vpack.c.bf16 %v1605, %v1605
      %v1662 = vpack.c.bf16 %v1606, %v1606
      %v1663 = vpack.c.bf16 %v1607, %v1607
      %v1664 = vpack.c.bf16 %v1608, %v1608
      %v1665 = vpack.c.bf16 %v1609, %v1609
      %v1666 = vpack.c.bf16 %v1610, %v1610
      %v1667 = vld [vmem:[%s7] sm:$0x1]
      %v1668 = vpack.c.bf16 %v1667, %v1667
      %v1670 = vpack.i.b16 %v1668, %v1668
      %v1672 = vlaneseq
      %v1673 = vshrl.u32 %v1672, 7
      %v1674 = vsub.s32 0, %v1673
      %v1675 = vrot.slane %v1670, %v1674
      %v1676 = vadd.bf16 %v1611, %v1675
      %v1677 = vadd.bf16 %v1612, %v1675
      %v1678 = vadd.bf16 %v1613, %v1675
      %v1679 = vadd.bf16 %v1614, %v1675
      %v1680 = vadd.bf16 %v1615, %v1675
      %v1681 = vadd.bf16 %v1616, %v1675
      %v1682 = vadd.bf16 %v1617, %v1675
      %v1683 = vadd.bf16 %v1618, %v1675
      %v1684 = vadd.bf16 %v1619, %v1675
      %v1685 = vadd.bf16 %v1620, %v1675
      %v1686 = vadd.bf16 %v1621, %v1675
      %v1687 = vadd.bf16 %v1622, %v1675
      %v1688 = vadd.bf16 %v1623, %v1675
      %v1689 = vadd.bf16 %v1624, %v1675
      %v1690 = vadd.bf16 %v1625, %v1675
      %v1691 = vadd.bf16 %v1626, %v1675
      %v1692 = vadd.bf16 %v1627, %v1675
      %v1693 = vadd.bf16 %v1628, %v1675
      %v1694 = vadd.bf16 %v1629, %v1675
      %v1695 = vadd.bf16 %v1630, %v1675
      %v1696 = vadd.bf16 %v1631, %v1675
      %v1697 = vadd.bf16 %v1632, %v1675
      %v1698 = vadd.bf16 %v1633, %v1675
      %v1699 = vadd.bf16 %v1634, %v1675
      %v1700 = vadd.bf16 %v1635, %v1675
      %v1701 = vadd.bf16 %v1636, %v1675
      %v1702 = vadd.bf16 %v1637, %v1675
      %v1703 = vadd.bf16 %v1638, %v1675
      %v1704 = vadd.bf16 %v1639, %v1675
      %v1705 = vadd.bf16 %v1640, %v1675
      %v1706 = vadd.bf16 %v1641, %v1675
      %v1707 = vadd.bf16 %v1642, %v1675
      %v1708 = vadd.bf16 %v1643, %v1675
      %v1709 = vadd.bf16 %v1644, %v1675
      %v1710 = vadd.bf16 %v1645, %v1675
      %v1711 = vadd.bf16 %v1646, %v1675
      %v1712 = vadd.bf16 %v1647, %v1675
      %v1713 = vadd.bf16 %v1648, %v1675
      %v1714 = vadd.bf16 %v1649, %v1675
      %v1715 = vadd.bf16 %v1650, %v1675
      %v1716 = vadd.bf16 %v1651, %v1675
      %v1717 = vadd.bf16 %v1652, %v1675
      %v1718 = vadd.bf16 %v1653, %v1675
      %v1719 = vadd.bf16 %v1654, %v1675
      %v1720 = vadd.bf16 %v1655, %v1675
      %v1721 = vadd.bf16 %v1656, %v1675
      %v1722 = vadd.bf16 %v1657, %v1675
      %v1723 = vadd.bf16 %v1658, %v1675
      %v1724 = vadd.bf16 %v1659, %v1675
      %v1725 = vadd.bf16 %v1660, %v1675
      %v1726 = vadd.bf16 %v1661, %v1675
      %v1727 = vadd.bf16 %v1662, %v1675
      %v1728 = vadd.bf16 %v1663, %v1675
      %v1729 = vadd.bf16 %v1664, %v1675
      %v1730 = vadd.bf16 %v1665, %v1675
      %v1731 = vadd.bf16 %v1666, %v1675
      %v1732 = vmax.bf16 %v1676, 0
      %v1733 = vmax.bf16 %v1677, 0
      %v1734 = vmax.bf16 %v1678, 0
      %v1735 = vmax.bf16 %v1679, 0
      %v1736 = vmax.bf16 %v1680, 0
      %v1737 = vmax.bf16 %v1681, 0
      %v1738 = vmax.bf16 %v1682, 0
      %v1739 = vmax.bf16 %v1683, 0
      %v1740 = vmax.bf16 %v1684, 0
      %v1741 = vmax.bf16 %v1685, 0
      %v1742 = vmax.bf16 %v1686, 0
      %v1743 = vmax.bf16 %v1687, 0
      %v1744 = vmax.bf16 %v1688, 0
      %v1745 = vmax.bf16 %v1689, 0
      %v1746 = vmax.bf16 %v1690, 0
      %v1747 = vmax.bf16 %v1691, 0
      %v1748 = vmax.bf16 %v1692, 0
      %v1749 = vmax.bf16 %v1693, 0
      %v1750 = vmax.bf16 %v1694, 0
      %v1751 = vmax.bf16 %v1695, 0
      %v1752 = vmax.bf16 %v1696, 0
      %v1753 = vmax.bf16 %v1697, 0
      %v1754 = vmax.bf16 %v1698, 0
      %v1755 = vmax.bf16 %v1699, 0
      %v1756 = vmax.bf16 %v1700, 0
      %v1757 = vmax.bf16 %v1701, 0
      %v1758 = vmax.bf16 %v1702, 0
      %v1759 = vmax.bf16 %v1703, 0
      %v1760 = vmax.bf16 %v1704, 0
      %v1761 = vmax.bf16 %v1705, 0
      %v1762 = vmax.bf16 %v1706, 0
      %v1763 = vmax.bf16 %v1707, 0
      %v1764 = vmax.bf16 %v1708, 0
      %v1765 = vmax.bf16 %v1709, 0
      %v1766 = vmax.bf16 %v1710, 0
      %v1767 = vmax.bf16 %v1711, 0
      %v1768 = vmax.bf16 %v1712, 0
      %v1769 = vmax.bf16 %v1713, 0
      %v1770 = vmax.bf16 %v1714, 0
      %v1771 = vmax.bf16 %v1715, 0
      %v1772 = vmax.bf16 %v1716, 0
      %v1773 = vmax.bf16 %v1717, 0
      %v1774 = vmax.bf16 %v1718, 0
      %v1775 = vmax.bf16 %v1719, 0
      %v1776 = vmax.bf16 %v1720, 0
      %v1777 = vmax.bf16 %v1721, 0
      %v1778 = vmax.bf16 %v1722, 0
      %v1779 = vmax.bf16 %v1723, 0
      %v1780 = vmax.bf16 %v1724, 0
      %v1781 = vmax.bf16 %v1725, 0
      %v1782 = vmax.bf16 %v1726, 0
      %v1783 = vmax.bf16 %v1727, 0
      %v1784 = vmax.bf16 %v1728, 0
      %v1785 = vmax.bf16 %v1729, 0
      %v1786 = vmax.bf16 %v1730, 0
      %v1787 = vmax.bf16 %v1731, 0
      %vm1788 = vcmask 57344
      %vm1789 = vsmask.f32 256
      %vm1790 = vmand %vm1788, %vm1789
      %v1791 = vsel %vm1790, %v1732, 4286644096
      %v1792 = vsel %vm1790, %v1733, 4286644096
      %v1793 = vmax.bf16 %v1791, %v1792
      %v1794 = vsel %vm1790, %v1734, 4286644096
      %v1795 = vmax.bf16 %v1793, %v1794
      %v1796 = vsel %vm1790, %v1735, 4286644096
      %v1797 = vmax.bf16 %v1795, %v1796
      %v1798 = vsel %vm1790, %v1736, 4286644096
      %v1799 = vmax.bf16 %v1797, %v1798
      %v1800 = vsel %vm1790, %v1737, 4286644096
      %v1801 = vmax.bf16 %v1799, %v1800
      %v1802 = vsel %vm1790, %v1738, 4286644096
      %v1803 = vmax.bf16 %v1801, %v1802
      %v1804 = vsel %vm1790, %v1739, 4286644096
      %v1805 = vsel %vm1790, %v1740, 4286644096
      %v1806 = vmax.bf16 %v1804, %v1805
      %v1807 = vsel %vm1790, %v1741, 4286644096
      %v1808 = vmax.bf16 %v1806, %v1807
      %v1809 = vsel %vm1790, %v1742, 4286644096
      %v1810 = vmax.bf16 %v1808, %v1809
      %v1811 = vsel %vm1790, %v1743, 4286644096
      %v1812 = vmax.bf16 %v1810, %v1811
      %v1813 = vsel %vm1790, %v1744, 4286644096
      %v1814 = vmax.bf16 %v1812, %v1813
      %v1815 = vsel %vm1790, %v1745, 4286644096
      %v1816 = vmax.bf16 %v1814, %v1815
      %v1817 = vsel %vm1790, %v1746, 4286644096
      %v1818 = vsel %vm1790, %v1747, 4286644096
      %v1819 = vmax.bf16 %v1817, %v1818
      %v1820 = vsel %vm1790, %v1748, 4286644096
      %v1821 = vmax.bf16 %v1819, %v1820
      %v1822 = vsel %vm1790, %v1749, 4286644096
      %v1823 = vmax.bf16 %v1821, %v1822
      %v1824 = vsel %vm1790, %v1750, 4286644096
      %v1825 = vmax.bf16 %v1823, %v1824
      %v1826 = vsel %vm1790, %v1751, 4286644096
      %v1827 = vmax.bf16 %v1825, %v1826
      %v1828 = vsel %vm1790, %v1752, 4286644096
      %v1829 = vmax.bf16 %v1827, %v1828
      %v1830 = vsel %vm1790, %v1753, 4286644096
      %v1831 = vsel %vm1790, %v1754, 4286644096
      %v1832 = vmax.bf16 %v1830, %v1831
      %v1833 = vsel %vm1790, %v1755, 4286644096
      %v1834 = vmax.bf16 %v1832, %v1833
      %v1835 = vsel %vm1790, %v1756, 4286644096
      %v1836 = vmax.bf16 %v1834, %v1835
      %v1837 = vsel %vm1790, %v1757, 4286644096
      %v1838 = vmax.bf16 %v1836, %v1837
      %v1839 = vsel %vm1790, %v1758, 4286644096
      %v1840 = vmax.bf16 %v1838, %v1839
      %v1841 = vsel %vm1790, %v1759, 4286644096
      %v1842 = vmax.bf16 %v1840, %v1841
      %v1843 = vsel %vm1790, %v1760, 4286644096
      %v1844 = vsel %vm1790, %v1761, 4286644096
      %v1845 = vmax.bf16 %v1843, %v1844
      %v1846 = vsel %vm1790, %v1762, 4286644096
      %v1847 = vmax.bf16 %v1845, %v1846
      %v1848 = vsel %vm1790, %v1763, 4286644096
      %v1849 = vmax.bf16 %v1847, %v1848
      %v1850 = vsel %vm1790, %v1764, 4286644096
      %v1851 = vmax.bf16 %v1849, %v1850
      %v1852 = vsel %vm1790, %v1765, 4286644096
      %v1853 = vmax.bf16 %v1851, %v1852
      %v1854 = vsel %vm1790, %v1766, 4286644096
      %v1855 = vmax.bf16 %v1853, %v1854
      %v1856 = vsel %vm1790, %v1767, 4286644096
      %v1857 = vsel %vm1790, %v1768, 4286644096
      %v1858 = vmax.bf16 %v1856, %v1857
      %v1859 = vsel %vm1790, %v1769, 4286644096
      %v1860 = vmax.bf16 %v1858, %v1859
      %v1861 = vsel %vm1790, %v1770, 4286644096
      %v1862 = vmax.bf16 %v1860, %v1861
      %v1863 = vsel %vm1790, %v1771, 4286644096
      %v1864 = vmax.bf16 %v1862, %v1863
      %v1865 = vsel %vm1790, %v1772, 4286644096
      %v1866 = vmax.bf16 %v1864, %v1865
      %v1867 = vsel %vm1790, %v1773, 4286644096
      %v1868 = vmax.bf16 %v1866, %v1867
      %v1869 = vsel %vm1790, %v1774, 4286644096
      %v1870 = vsel %vm1790, %v1775, 4286644096
      %v1871 = vmax.bf16 %v1869, %v1870
      %v1872 = vsel %vm1790, %v1776, 4286644096
      %v1873 = vmax.bf16 %v1871, %v1872
      %v1874 = vsel %vm1790, %v1777, 4286644096
      %v1875 = vmax.bf16 %v1873, %v1874
      %v1876 = vsel %vm1790, %v1778, 4286644096
      %v1877 = vmax.bf16 %v1875, %v1876
      %v1878 = vsel %vm1790, %v1779, 4286644096
      %v1879 = vmax.bf16 %v1877, %v1878
      %v1880 = vsel %vm1790, %v1780, 4286644096
      %v1881 = vmax.bf16 %v1879, %v1880
      %v1882 = vsel %vm1790, %v1781, 4286644096
      %v1883 = vsel %vm1790, %v1782, 4286644096
      %v1884 = vmax.bf16 %v1882, %v1883
      %v1885 = vsel %vm1790, %v1783, 4286644096
      %v1886 = vmax.bf16 %v1884, %v1885
      %v1887 = vsel %vm1790, %v1784, 4286644096
      %v1888 = vmax.bf16 %v1886, %v1887
      %v1889 = vsel %vm1790, %v1785, 4286644096
      %v1890 = vmax.bf16 %v1888, %v1889
      %v1891 = vsel %vm1790, %v1786, 4286644096
      %v1892 = vmax.bf16 %v1890, %v1891
      %v1893 = vsel %vm1790, %v1787, 4286644096
      %v1894 = vmax.bf16 %v1892, %v1893
      %v1903 = vunpack.c.l.b16 %v654
      %v1904 = vunpack.c.l.b16 %v667
      %v1905 = vunpack.c.l.b16 %v680
      %v1906 = vunpack.c.l.b16 %v693
      %v1907 = vunpack.c.l.b16 %v706
      %v1908 = vunpack.c.l.b16 %v719
      %v1909 = vunpack.c.l.b16 %v732
      %v1910 = vunpack.c.l.b16 %v745
      %vm1911 = vcmask 1041409
      %v1912 = vsel %vm1911, %v1904, %v1903
      %vm1913 = vcmask 1042434
      %v1914 = vsel %vm1913, %v1905, %v1912
      %vm1915 = vcmask 1043459
      %v1916 = vsel %vm1915, %v1906, %v1914
      %vm1917 = vcmask 1044484
      %v1918 = vsel %vm1917, %v1907, %v1916
      %vm1919 = vcmask 1045509
      %v1920 = vsel %vm1919, %v1908, %v1918
      %vm1921 = vcmask 1046534
      %v1922 = vsel %vm1921, %v1909, %v1920
      %vm1923 = vcmask 1047559
      %v1924 = vsel %vm1923, %v1910, %v1922
      %v1925 = vpack.c.b16 %v1924, %v1924
      %v1934 = vunpack.c.l.b16 %v1803
      %v1935 = vunpack.c.l.b16 %v1816
      %v1936 = vunpack.c.l.b16 %v1829
      %v1937 = vunpack.c.l.b16 %v1842
      %v1938 = vunpack.c.l.b16 %v1855
      %v1939 = vunpack.c.l.b16 %v1868
      %v1940 = vunpack.c.l.b16 %v1881
      %v1941 = vunpack.c.l.b16 %v1894
      %v1942 = vrot.slane %v1935, 7
      %v1943 = vsel %vm1911, %v1942, %v1934
      %v1944 = vrot.slane %v1936, 6
      %v1945 = vsel %vm1913, %v1944, %v1943
      %v1946 = vrot.slane %v1937, 5
      %v1947 = vsel %vm1915, %v1946, %v1945
      %v1948 = vrot.slane %v1938, 4
      %v1949 = vsel %vm1917, %v1948, %v1947
      %v1950 = vrot.slane %v1939, 3
      %v1951 = vsel %vm1919, %v1950, %v1949
      %v1952 = vrot.slane %v1940, 2
      %v1953 = vsel %vm1921, %v1952, %v1951
      %v1954 = vrot.slane %v1941, 1
      %v1955 = vsel %vm1923, %v1954, %v1953
      %v1956 = vpack.c.b16 %v1955, %v1955
      %1957 = vrot.lane.b32.xlu0 %v1956, 8
      %v1958 = vpop.permute.xlu0 %1957
      %vm1959 = vcmask 64512
      %v1962 = vsel %vm1959, %v1925, %v1958
      %v1964 = vsel %vm366, %v1962, 0
      %1966 = vst [vmem:[%s327] sm:$0xf] %v1964
      %p1967 = scmp.lt.s32.totalorder %s19, 1
      %s1968 = scalar_select %p1967, %s19, 1
      %s1969 = smul.addr %s1968, 4
      %s1970 = scalar_lea.vmem %s8, %s1969
      // Predicated region
      $region53: #{attention_model_forward.2} parent=51 // pred_check
        %p1971 = pneg %p215
      $region54: #{attention_model_forward.2} parent=51 // pred_check_branch
        %1973 = sbr.rel (%p1971) target = $region56
      $region55: #{attention_model_forward.2} parent=51 // pred_region
        _
      $region56: #{attention_model_forward.2} parent=51 // pred_fallthru
        _
    $region52: #{attention_model_forward.2} parent=5 // pred_fallthru
      _
    %p1974 = scmp.le.s32.totalorder 2, %s14
    // Predicated region
    $region57: #{attention_model_forward.2} parent=5 // pred_check
      %p1975 = pneg %p1974
    $region58: #{attention_model_forward.2} parent=5 // pred_check_branch
      %1977 = sbr.rel (%p1975) target = $region60
    $region59: #{attention_model_forward.2} parent=5 // pred_region
      %s1978 = ssub.s32 %s14, 2
      // Predicated region
      $region61: #{attention_model_forward.2} parent=59 // pred_check
        %p1979 = pneg %p221
      $region62: #{attention_model_forward.2} parent=59 // pred_check_branch
        %1981 = sbr.rel (%p1979) target = $region64
      $region63: #{attention_model_forward.2} parent=59 // pred_region
        %p1982 = scmp.lt.s32.totalorder %s20, 1
        %s1983 = scalar_select %p1982, %s20, 1
        %s1984 = smul.addr %s1983, 4
        %s1985 = scalar_lea.vmem %s8, %s1984
      $region64: #{attention_model_forward.2} parent=59 // pred_fallthru
        _
    $region60: #{attention_model_forward.2} parent=5 // pred_fallthru
      _
  $region6: #{attention_model_forward.2} parent=0 // loop_footer
    %s18 = sadd.s32 1, %s14
  $region7: #{attention_model_forward.2} parent=0 // loop_footer_branch
    %13 = sbr.rel target = $region3
  $region8: #{attention_model_forward.2} parent=0 // loop_exit
    _

</llo_original>
